<compile_context>
chip_gen: v6e
topology: v6e:2x2x1
jax: 0.10.0
libtpu: 0.0.40
codegen_flags: <defaults>
</compile_context>

<pallas_src>
import functools

import jax
import jax.numpy as jnp
from jax.experimental import pallas as pl
from jax.experimental.pallas import tpu as pltpu


def _row_col(pos, W):
    """(h, w) indices of a flattened h*W + w position, division-free for pow2 W."""
    if (W & (W - 1)) == 0:
        shift = W.bit_length() - 1
        return pos >> shift, pos & (W - 1)
    # TODO(synk): non-power-of-two W relies on Mosaic s32 div/rem lowering.
    return pos // W, pos % W


def local_att_kernel(H, W, B_blk, x_ref, w1_ref, bshift_ref, wh_ref, ww_ref,
                     out_ref):
    C = x_ref.shape[1]
    HW = H * W
    L = H + W

    # ---- indicator constants generated in-kernel (iota + compare) ----------
    # pool[hw, j] : j < H  -> 1/W if hw is in row j   (mean over W)
    #               j >= H -> 1/H if hw is in col j-H (mean over H)
    pos = jax.lax.broadcasted_iota(jnp.int32, (HW, L), 0)
    slot = jax.lax.broadcasted_iota(jnp.int32, (HW, L), 1)
    row, col = _row_col(pos, W)
    pool = jnp.where(slot < H,
                     jnp.where(slot == row, 1.0 / W, 0.0),
                     jnp.where(slot - H == col, 1.0 / H, 0.0)).astype(jnp.float32)

    posh = jax.lax.broadcasted_iota(jnp.int32, (H, HW), 1)
    hidx = jax.lax.broadcasted_iota(jnp.int32, (H, HW), 0)
    rowh, _ = _row_col(posh, W)
    e_h = (hidx == rowh).astype(jnp.float32)                      # (H, HW)

    posw = jax.lax.broadcasted_iota(jnp.int32, (W, HW), 1)
    widx = jax.lax.broadcasted_iota(jnp.int32, (W, HW), 0)
    _, colw = _row_col(posw, W)
    e_w = (widx == colw).astype(jnp.float32)                      # (W, HW)

    # ---- fused mean pooling: one matmul, sub-batch folded into the M dim ---
    x2d = x_ref[...].reshape(B_blk * C, HW).astype(jnp.float32)
    cat = jnp.dot(x2d, pool, preferred_element_type=jnp.float32)  # (B_blk*C, H+W)

    w1 = w1_ref[...]        # (mid, C) -- eval-BN scale already folded in
    bsh = bshift_ref[...]   # (mid, 1)
    wh = wh_ref[...]        # (C, mid)
    ww = ww_ref[...]        # (C, mid)

    n_col = 128 if (HW % 128 == 0) else HW
    for b in range(B_blk):                           # static, small unroll
        cat_b = cat[b * C:(b + 1) * C, :]                          # (C, H+W)
        # conv_1x1 + folded BN(eval) + ReLU
        y = jnp.maximum(
            jnp.dot(w1, cat_b, preferred_element_type=jnp.float32) + bsh, 0.0)
        # F_h / F_w back to C channels + sigmoid
        s_h = jax.nn.sigmoid(
            jnp.dot(wh, y[:, :H], preferred_element_type=jnp.float32))   # (C, H)
        s_w = jax.nn.sigmoid(
            jnp.dot(ww, y[:, H:], preferred_element_type=jnp.float32))   # (C, W)
        # Gate expansion (indicator matmuls, MXU) + apply, in 128-lane chunks
        # so the live set stays far below the 64-vreg file.
        for c0 in range(0, HW, n_col):
            g = (jnp.dot(s_h, e_h[:, c0:c0 + n_col],
                         preferred_element_type=jnp.float32) *
                 jnp.dot(s_w, e_w[:, c0:c0 + n_col],
                         preferred_element_type=jnp.float32))            # (C, n_col)
            xc = x_ref[b, :, c0:c0 + n_col].astype(jnp.float32)
            out_ref[b, :, c0:c0 + n_col] = (xc * g).astype(out_ref.dtype)


def _choose_b_blk(B, C, HW, itemsize, vmem_budget_bytes=12 << 20, max_blk=8):
    """Largest divisor of B (<= max_blk) whose double-buffered x/out blocks fit
    the VMEM budget, preferring an even number of grid steps (v7x megacore)."""
    per_img = C * HW * itemsize
    cap = max(1, vmem_budget_bytes // (4 * per_img))   # 2x in + 2x out buffers
    cap = min(cap, max_blk, B)
    divisors = [d for d in range(1, cap + 1) if B % d == 0]
    even = [d for d in divisors if (B // d) % 2 == 0]
    return max(even) if even else max(divisors)


def local_att_pallas(x, w1, bn_gamma, bn_beta, bn_mean, bn_var, wh, ww,
                     eps=1e-5):
    B, C, H, W = x.shape
    HW = H * W
    mid = w1.shape[0]

    # Fold eval-mode BatchNorm: scale goes directly into the 1x1-conv weight.
    inv_std = 1.0 / jnp.sqrt(bn_var + eps)
    scale = bn_gamma * inv_std
    w1_folded = (w1 * scale[:, None]).astype(jnp.float32)                 # (mid, C)
    bn_shift = (bn_beta - bn_mean * scale).reshape(mid, 1).astype(jnp.float32)

    x_flat = x.reshape(B, C, HW)                      # free reshape in NCHW
    b_blk = _choose_b_blk(B, C, HW, x.dtype.itemsize)
    n_steps = B // b_blk

    out_flat = pl.pallas_call(
        functools.partial(local_att_kernel, H, W, b_blk),
        out_shape=jax.ShapeDtypeStruct((B, C, HW), x.dtype),
        grid_spec=pltpu.PrefetchScalarGridSpec(
            num_scalar_prefetch=0,
            grid=(n_steps,),
            in_specs=[
                pl.BlockSpec((b_blk, C, HW), lambda i: (i, 0, 0)),   # x
                pl.BlockSpec((mid, C), lambda i: (0, 0)),            # w1 (BN-folded)
                pl.BlockSpec((mid, 1), lambda i: (0, 0)),            # bn shift
                pl.BlockSpec((C, mid), lambda i: (0, 0)),            # wh
                pl.BlockSpec((C, mid), lambda i: (0, 0)),            # ww
            ],
            out_specs=pl.BlockSpec((b_blk, C, HW), lambda i: (i, 0, 0)),
        ),
        compiler_params=pltpu.CompilerParams(
            dimension_semantics=("parallel",)),
    )(x_flat, w1_folded, bn_shift,
      wh.astype(jnp.float32), ww.astype(jnp.float32))

    return out_flat.reshape(B, C, H, W)


def local_att_reference(x, w1, bn_gamma, bn_beta, bn_mean, bn_var, wh, ww,
                        eps=1e-5):
    """Pure-JAX reference mirroring the PyTorch forward (eval-mode BN)."""
    B, C, H, W = x.shape
    x_h = jnp.mean(x, axis=3)                       # (B, C, H)
    x_w = jnp.mean(x, axis=2)                       # (B, C, W)
    cat = jnp.concatenate([x_h, x_w], axis=-1)      # (B, C, H+W)
    y = jnp.einsum('mc,bcl->bml', w1, cat)          # conv_1x1
    inv_std = 1.0 / jnp.sqrt(bn_var + eps)
    y = (y - bn_mean[None, :, None]) * inv_std[None, :, None]
    y = y * bn_gamma[None, :, None] + bn_beta[None, :, None]
    y = jnp.maximum(y, 0.0)
    y_h, y_w = y[..., :H], y[..., H:]
    s_h = jax.nn.sigmoid(jnp.einsum('cm,bml->bcl', wh, y_h))   # (B, C, H)
    s_w = jax.nn.sigmoid(jnp.einsum('cm,bml->bcl', ww, y_w))   # (B, C, W)
    return x * s_h[:, :, :, None] * s_w[:, :, None, :]


if __name__ == "__main__":
    # Small shapes consistent with the module: reduction=16 => C must be >= 16.
    B, C, H, W = 2, 64, 16, 16
    reduction = 16
    mid = C // reduction

    key = jax.random.PRNGKey(0)
    kx, k1, k2, k3, kg, kb = jax.random.split(key, 6)

    x = jax.random.normal(kx, (B, C, H, W), dtype=jnp.float32)

    # Deterministic parameter init (conv weights squeezed from (out,in,1,1)).
    w1 = jax.random.normal(k1, (mid, C), dtype=jnp.float32) * (1.0 / jnp.sqrt(C))
    wh = jax.random.normal(k2, (C, mid), dtype=jnp.float32) * (1.0 / jnp.sqrt(mid))
    ww = jax.random.normal(k3, (C, mid), dtype=jnp.float32) * (1.0 / jnp.sqrt(mid))
    bn_gamma = 1.0 + 0.1 * jax.random.normal(kg, (mid,), dtype=jnp.float32)
    bn_beta = 0.1 * jax.random.normal(kb, (mid,), dtype=jnp.float32)
    bn_mean = jnp.zeros((mid,), dtype=jnp.float32)
    bn_var = jnp.ones((mid,), dtype=jnp.float32)

    out = local_att_pallas(x, w1, bn_gamma, bn_beta, bn_mean, bn_var, wh, ww)
    out = jax.block_until_ready(out)

    ref = local_att_reference(x, w1, bn_gamma, bn_beta, bn_mean, bn_var, wh, ww)
    assert out.shape == (B, C, H, W)
    assert jnp.allclose(out, ref, atol=5e-5, rtol=5e-5), "mismatch vs reference"

    print("KERNEL_OK")
</pallas_src>

<mosaic_0001>
module attributes {stable_mosaic.version = 11 : i64} {
  func.func @local_att_kernel(%arg0: i32, %arg1: memref<1x64x256xf32, #tpu.memory_space<vmem>>, %arg2: memref<4x64xf32, #tpu.memory_space<vmem>>, %arg3: memref<4x1xf32, #tpu.memory_space<vmem>>, %arg4: memref<64x4xf32, #tpu.memory_space<vmem>>, %arg5: memref<64x4xf32, #tpu.memory_space<vmem>>, %arg6: memref<1x64x256xf32, #tpu.memory_space<vmem>>) attributes {dimension_semantics = [#tpu.dimension_semantics<parallel>], iteration_bounds = array<i64: 2>, scalar_prefetch = 0 : i64, scratch_operands = 0 : i64, tpu.core_type = #tpu.core_type<tc>, window_params = [{transform_indices = @transform_0, window_bounds = array<i64: 1, 64, 256>}, {pipeline_mode = #tpu.pipeline_mode<synchronous>, transform_indices = @transform_1, window_bounds = array<i64: 4, 64>}, {pipeline_mode = #tpu.pipeline_mode<synchronous>, transform_indices = @transform_2, window_bounds = array<i64: 4, 1>}, {pipeline_mode = #tpu.pipeline_mode<synchronous>, transform_indices = @transform_3, window_bounds = array<i64: 64, 4>}, {pipeline_mode = #tpu.pipeline_mode<synchronous>, transform_indices = @transform_4, window_bounds = array<i64: 64, 4>}, {transform_indices = @transform_5, window_bounds = array<i64: 1, 64, 256>}]} {
    %0 = tpu.iota {dimensions = array<i32: 0>} : vector<256x32xi32>
    %1 = tpu.iota {dimensions = array<i32: 1>} : vector<256x32xi32>
    %c4_i32 = arith.constant 4 : i32
    %2 = vector.broadcast %c4_i32 : i32 to vector<256x32xi32>
    %3 = arith.shrsi %0, %2 : vector<256x32xi32>
    %c15_i32 = arith.constant 15 : i32
    %4 = vector.broadcast %c15_i32 : i32 to vector<256x32xi32>
    %5 = arith.andi %0, %4 : vector<256x32xi32>
    %c16_i32 = arith.constant 16 : i32
    %6 = vector.broadcast %c16_i32 : i32 to vector<256x32xi32>
    %7 = arith.cmpi slt, %1, %6 : vector<256x32xi32>
    %8 = arith.cmpi eq, %1, %3 : vector<256x32xi32>
    %cst = arith.constant 6.250000e-02 : f32
    %cst_0 = arith.constant 0.000000e+00 : f32
    %9 = vector.broadcast %cst : f32 to vector<256x32xf32>
    %10 = vector.broadcast %cst_0 : f32 to vector<256x32xf32>
    %11 = arith.select %8, %9, %10 : vector<256x32xi1>, vector<256x32xf32>
    %c16_i32_1 = arith.constant 16 : i32
    %12 = vector.broadcast %c16_i32_1 : i32 to vector<256x32xi32>
    %13 = arith.subi %1, %12 : vector<256x32xi32>
    %14 = arith.cmpi eq, %13, %5 : vector<256x32xi32>
    %cst_2 = arith.constant 6.250000e-02 : f32
    %cst_3 = arith.constant 0.000000e+00 : f32
    %15 = vector.broadcast %cst_2 : f32 to vector<256x32xf32>
    %16 = vector.broadcast %cst_3 : f32 to vector<256x32xf32>
    %17 = arith.select %14, %15, %16 : vector<256x32xi1>, vector<256x32xf32>
    %18 = arith.select %7, %11, %17 : vector<256x32xi1>, vector<256x32xf32>
    %19 = tpu.iota {dimensions = array<i32: 1>} : vector<16x256xi32>
    %20 = tpu.iota {dimensions = array<i32: 0>} : vector<16x256xi32>
    %c4_i32_4 = arith.constant 4 : i32
    %21 = vector.broadcast %c4_i32_4 : i32 to vector<16x256xi32>
    %22 = arith.shrsi %19, %21 : vector<16x256xi32>
    %23 = arith.cmpi eq, %20, %22 : vector<16x256xi32>
    %24 = arith.extui %23 : vector<16x256xi1> to vector<16x256xi32>
    %25 = arith.sitofp %24 : vector<16x256xi32> to vector<16x256xf32>
    %26 = tpu.iota {dimensions = array<i32: 1>} : vector<16x256xi32>
    %27 = tpu.iota {dimensions = array<i32: 0>} : vector<16x256xi32>
    %c15_i32_5 = arith.constant 15 : i32
    %28 = vector.broadcast %c15_i32_5 : i32 to vector<16x256xi32>
    %29 = arith.andi %26, %28 : vector<16x256xi32>
    %30 = arith.cmpi eq, %27, %29 : vector<16x256xi32>
    %31 = arith.extui %30 : vector<16x256xi1> to vector<16x256xi32>
    %32 = arith.sitofp %31 : vector<16x256xi32> to vector<16x256xf32>
    %c0 = arith.constant 0 : index
    %c0_6 = arith.constant 0 : index
    %c0_7 = arith.constant 0 : index
    %33 = vector.load %arg1[%c0, %c0_6, %c0_7] : memref<1x64x256xf32, #tpu.memory_space<vmem>>, vector<1x64x256xf32>
    %34 = vector.shape_cast %33 : vector<1x64x256xf32> to vector<64x256xf32>
    %cst_8 = arith.constant dense<0.000000e+00> : vector<64x32xf32>
    %35 = tpu.matmul %34, %18, %cst_8 {dimension_numbers = #tpu.dot_dimension_numbers<[1], [0], [0], [1], [0, 0, 1, 1], [], []>} : vector<64x256xf32>, vector<256x32xf32>, vector<64x32xf32> -> vector<64x32xf32>
    %c0_9 = arith.constant 0 : index
    %c0_10 = arith.constant 0 : index
    %36 = vector.load %arg2[%c0_9, %c0_10] : memref<4x64xf32, #tpu.memory_space<vmem>>, vector<4x64xf32>
    %c0_11 = arith.constant 0 : index
    %c0_12 = arith.constant 0 : index
    %37 = vector.load %arg3[%c0_11, %c0_12] : memref<4x1xf32, #tpu.memory_space<vmem>>, vector<4x1xf32>
    %c0_13 = arith.constant 0 : index
    %c0_14 = arith.constant 0 : index
    %38 = vector.load %arg4[%c0_13, %c0_14] : memref<64x4xf32, #tpu.memory_space<vmem>>, vector<64x4xf32>
    %c0_15 = arith.constant 0 : index
    %c0_16 = arith.constant 0 : index
    %39 = vector.load %arg5[%c0_15, %c0_16] : memref<64x4xf32, #tpu.memory_space<vmem>>, vector<64x4xf32>
    %cst_17 = arith.constant dense<0.000000e+00> : vector<4x32xf32>
    %40 = tpu.matmul %36, %35, %cst_17 {dimension_numbers = #tpu.dot_dimension_numbers<[1], [0], [0], [1], [0, 0, 1, 1], [], []>} : vector<4x64xf32>, vector<64x32xf32>, vector<4x32xf32> -> vector<4x32xf32>
    %41 = vector.broadcast %37 : vector<4x1xf32> to vector<4x32xf32>
    %42 = arith.addf %40, %41 : vector<4x32xf32>
    %cst_18 = arith.constant 0.000000e+00 : f32
    %43 = vector.broadcast %cst_18 : f32 to vector<4x32xf32>
    %44 = arith.maximumf %42, %43 : vector<4x32xf32>
    %45 = vector.extract_strided_slice %44 {offsets = [0, 0], sizes = [4, 16], strides = [1, 1]} : vector<4x32xf32> to vector<4x16xf32>
    %cst_19 = arith.constant dense<0.000000e+00> : vector<64x16xf32>
    %46 = tpu.matmul %38, %45, %cst_19 {dimension_numbers = #tpu.dot_dimension_numbers<[1], [0], [0], [1], [0, 0, 1, 1], [], []>} : vector<64x4xf32>, vector<4x16xf32>, vector<64x16xf32> -> vector<64x16xf32>
    %47 = arith.negf %46 : vector<64x16xf32>
    %48 = math.exp %47 : vector<64x16xf32>
    %cst_20 = arith.constant 1.000000e+00 : f32
    %49 = vector.broadcast %cst_20 : f32 to vector<64x16xf32>
    %50 = arith.addf %49, %48 : vector<64x16xf32>
    %51 = arith.divf %49, %50 : vector<64x16xf32>
    %52 = vector.extract_strided_slice %44 {offsets = [0, 16], sizes = [4, 16], strides = [1, 1]} : vector<4x32xf32> to vector<4x16xf32>
    %cst_21 = arith.constant dense<0.000000e+00> : vector<64x16xf32>
    %53 = tpu.matmul %39, %52, %cst_21 {dimension_numbers = #tpu.dot_dimension_numbers<[1], [0], [0], [1], [0, 0, 1, 1], [], []>} : vector<64x4xf32>, vector<4x16xf32>, vector<64x16xf32> -> vector<64x16xf32>
    %54 = arith.negf %53 : vector<64x16xf32>
    %55 = math.exp %54 : vector<64x16xf32>
    %cst_22 = arith.constant 1.000000e+00 : f32
    %56 = vector.broadcast %cst_22 : f32 to vector<64x16xf32>
    %57 = arith.addf %56, %55 : vector<64x16xf32>
    %58 = arith.divf %56, %57 : vector<64x16xf32>
    %59 = vector.extract_strided_slice %25 {offsets = [0, 0], sizes = [16, 128], strides = [1, 1]} : vector<16x256xf32> to vector<16x128xf32>
    %cst_23 = arith.constant dense<0.000000e+00> : vector<64x128xf32>
    %60 = tpu.matmul %51, %59, %cst_23 {dimension_numbers = #tpu.dot_dimension_numbers<[1], [0], [0], [1], [0, 0, 1, 1], [], []>} : vector<64x16xf32>, vector<16x128xf32>, vector<64x128xf32> -> vector<64x128xf32>
    %61 = vector.extract_strided_slice %32 {offsets = [0, 0], sizes = [16, 128], strides = [1, 1]} : vector<16x256xf32> to vector<16x128xf32>
    %cst_24 = arith.constant dense<0.000000e+00> : vector<64x128xf32>
    %62 = tpu.matmul %58, %61, %cst_24 {dimension_numbers = #tpu.dot_dimension_numbers<[1], [0], [0], [1], [0, 0, 1, 1], [], []>} : vector<64x16xf32>, vector<16x128xf32>, vector<64x128xf32> -> vector<64x128xf32>
    %63 = arith.mulf %60, %62 : vector<64x128xf32>
    %c0_25 = arith.constant 0 : index
    %c0_26 = arith.constant 0 : index
    %c0_27 = arith.constant 0 : index
    %64 = vector.load %arg1[%c0_25, %c0_26, %c0_27] : memref<1x64x256xf32, #tpu.memory_space<vmem>>, vector<1x64x128xf32>
    %65 = vector.shape_cast %64 : vector<1x64x128xf32> to vector<64x128xf32>
    %66 = arith.mulf %65, %63 : vector<64x128xf32>
    %c0_28 = arith.constant 0 : index
    %c0_29 = arith.constant 0 : index
    %c0_30 = arith.constant 0 : index
    %67 = vector.load %arg6[%c0_28, %c0_29, %c0_30] : memref<1x64x256xf32, #tpu.memory_space<vmem>>, vector<1x64x128xf32>
    %68 = vector.shape_cast %67 : vector<1x64x128xf32> to vector<64x128xf32>
    %69 = vector.shape_cast %66 : vector<64x128xf32> to vector<1x64x128xf32>
    tpu.vector_store %arg6[%c0_28, %c0_29, %c0_30], %69 {strides = array<i32>} : memref<1x64x256xf32, #tpu.memory_space<vmem>>, vector<1x64x128xf32>,
    %70 = vector.extract_strided_slice %25 {offsets = [0, 128], sizes = [16, 128], strides = [1, 1]} : vector<16x256xf32> to vector<16x128xf32>
    %cst_31 = arith.constant dense<0.000000e+00> : vector<64x128xf32>
    %71 = tpu.matmul %51, %70, %cst_31 {dimension_numbers = #tpu.dot_dimension_numbers<[1], [0], [0], [1], [0, 0, 1, 1], [], []>} : vector<64x16xf32>, vector<16x128xf32>, vector<64x128xf32> -> vector<64x128xf32>
    %72 = vector.extract_strided_slice %32 {offsets = [0, 128], sizes = [16, 128], strides = [1, 1]} : vector<16x256xf32> to vector<16x128xf32>
    %cst_32 = arith.constant dense<0.000000e+00> : vector<64x128xf32>
    %73 = tpu.matmul %58, %72, %cst_32 {dimension_numbers = #tpu.dot_dimension_numbers<[1], [0], [0], [1], [0, 0, 1, 1], [], []>} : vector<64x16xf32>, vector<16x128xf32>, vector<64x128xf32> -> vector<64x128xf32>
    %74 = arith.mulf %71, %73 : vector<64x128xf32>
    %c0_33 = arith.constant 0 : index
    %c0_34 = arith.constant 0 : index
    %c128 = arith.constant 128 : index
    %75 = vector.load %arg1[%c0_33, %c0_34, %c128] : memref<1x64x256xf32, #tpu.memory_space<vmem>>, vector<1x64x128xf32>
    %76 = vector.shape_cast %75 : vector<1x64x128xf32> to vector<64x128xf32>
    %77 = arith.mulf %76, %74 : vector<64x128xf32>
    %c0_35 = arith.constant 0 : index
    %c0_36 = arith.constant 0 : index
    %c128_37 = arith.constant 128 : index
    %78 = vector.load %arg6[%c0_35, %c0_36, %c128_37] : memref<1x64x256xf32, #tpu.memory_space<vmem>>, vector<1x64x128xf32>
    %79 = vector.shape_cast %78 : vector<1x64x128xf32> to vector<64x128xf32>
    %80 = vector.shape_cast %77 : vector<64x128xf32> to vector<1x64x128xf32>
    tpu.vector_store %arg6[%c0_35, %c0_36, %c128_37], %80 {strides = array<i32>} : memref<1x64x256xf32, #tpu.memory_space<vmem>>, vector<1x64x128xf32>,
    return
  }
  func.func @transform_0(%arg0: i32) -> (i32, i32, i32) {
    %c0_i32 = arith.constant 0 : i32
    %c0_i32_0 = arith.constant 0 : i32
    %c0_i32_1 = arith.constant 0 : i32
    return %arg0, %c0_i32, %c0_i32_0 : i32, i32, i32
  }
  func.func @transform_1(%arg0: i32) -> (i32, i32) {
    %c0_i32 = arith.constant 0 : i32
    %c0_i32_0 = arith.constant 0 : i32
    %c0_i32_1 = arith.constant 0 : i32
    return %c0_i32, %c0_i32_0 : i32, i32
  }
  func.func @transform_2(%arg0: i32) -> (i32, i32) {
    %c0_i32 = arith.constant 0 : i32
    %c0_i32_0 = arith.constant 0 : i32
    %c0_i32_1 = arith.constant 0 : i32
    return %c0_i32, %c0_i32_0 : i32, i32
  }
  func.func @transform_3(%arg0: i32) -> (i32, i32) {
    %c0_i32 = arith.constant 0 : i32
    %c0_i32_0 = arith.constant 0 : i32
    %c0_i32_1 = arith.constant 0 : i32
    return %c0_i32, %c0_i32_0 : i32, i32
  }
  func.func @transform_4(%arg0: i32) -> (i32, i32) {
    %c0_i32 = arith.constant 0 : i32
    %c0_i32_0 = arith.constant 0 : i32
    %c0_i32_1 = arith.constant 0 : i32
    return %c0_i32, %c0_i32_0 : i32, i32
  }
  func.func @transform_5(%arg0: i32) -> (i32, i32, i32) {
    %c0_i32 = arith.constant 0 : i32
    %c0_i32_0 = arith.constant 0 : i32
    %c0_i32_1 = arith.constant 0 : i32
    return %arg0, %c0_i32, %c0_i32_0 : i32, i32, i32
  }
}

</mosaic_0001>

<llo_original>
// kernel: tpu_custom_call.1
$region0: #{tpu_custom_call.1}
  #allocation0 [shape = 'u32[]', space=smem, size = 0x4, offset = 0x4, fixed_abs, tag = 'smem constant byte address 0x4 - core index']
  #allocation1 [shape = 'u32[144,128]{1,0:T(1,128)}', space=vmem, size = 0x12000, scoped, tag = 'internal scratch']
  %s0 = inlined_call_operand.hbm [shape: f32[2,64,256], index: 0, kind: input, shape index: {}]
  %s1 = inlined_call_operand.vmem [shape: f32[4,64], index: 1, kind: input, shape index: {}]
  %s2 = inlined_call_operand.vmem [shape: f32[4,1], index: 2, kind: input, shape index: {}]
  %s3 = inlined_call_operand.vmem [shape: f32[64,4], index: 3, kind: input, shape index: {}]
  %s4 = inlined_call_operand.vmem [shape: f32[64,4], index: 4, kind: input, shape index: {}]
  %s5 = inlined_call_operand.hbm [shape: f32[2,64,256], index: 5, kind: output, shape index: {}]
  %s6 = sld [smem:[#allocation0]]
  $region57: #{tpu_custom_call.1} parent=0
    _
  %s8 = ssub.s32 1, %s6
  %s9 = scalar_select 0, %s8, %s6
  $region1: #{tpu_custom_call.1} parent=0
    #allocation2 [shape = 'u8[131072]{0}', space=vmem, size = 0x20000, scoped, tag = 'input window, operand 0']
    #allocation3 [shape = 's32[2]{0}', space=sflag, size = 0x8, scoped, tag = 'scoped memory for tpu_custom_call.1']
    #allocation4 [shape = 's32[2]{0}', space=sflag, size = 0x8, scoped, tag = 'scoped memory for tpu_custom_call.1']
    #allocation5 [shape = 'u8[131072]{0}', space=vmem, size = 0x20000, scoped, tag = 'output window, operand 0']
    %10 = vsyncpa [#allocation3], 0
    %s11 = scalar_lea.sflag [#allocation3], 1
    %12 = vsyncpa %s11, 0
    %13 = vsyncpa [#allocation4], 0
    %s14 = scalar_lea.sflag [#allocation4], 1
    %15 = vsyncpa %s14, 0
    loop: start=0, step=1, limit=4
    $region2: #{tpu_custom_call.1} parent=1 // loop_pre_header
      _
    $region3: #{tpu_custom_call.1} parent=1 // loop_header
      %s17 = sphi 0, %s21
      %p18 = scmp.ge.s32.totalorder %s17, 4
      %s27 = sphi 0, %s29
      %s30 = sphi 0, %s27
      %s31 = sphi 0, %s30
      %s47 = sphi 0, %s31
      %s51 = sphi 0, %s51
      %s53 = sphi 0, %s51
      %s54 = sphi 0, %s53
      %s68 = sphi 0, %s54
      %s72 = sphi 0, %s72
      %s74 = sphi 0, %s72
      %s75 = sphi 0, %s74
      %s89 = sphi 0, %s75
      %s93 = sphi 0, %s93
      %s95 = sphi 0, %s93
      %s96 = sphi 0, %s95
      %s110 = sphi 0, %s96
      %s114 = sphi 0, %s114
      %s116 = sphi 0, %s114
      %s117 = sphi 0, %s116
      %s131 = sphi 0, %s117
      %s137 = sphi 0, %s139
      %s140 = sphi 0, %s137
      %s141 = sphi 0, %s140
      %s157 = sphi 0, %s141
    $region4: #{tpu_custom_call.1} parent=1 // loop_header_branch
      %20 = sbr.rel (%p18) target = $region8
    $region5: #{tpu_custom_call.1} parent=1 // loop_body
      %s22 = ssub.s32 %s17, 1
      %s23 = ssub.s32 %s17, 2
      %s24 = sadd.s32 %s17, 1
      %s25 = ssub.s32 %s17, %s24
      %p26 = scmp.eq.s32.totalorder %s25, 0
      %s28 = sadd.s32 %s27, 1
      %s29 = scalar_select %p26, %s27, %s28
      %p32 = pneg %p26
      %p33 = scmp.eq.s32.totalorder %s17, 1
      %p34 = por %p32, %p33
      %p35 = scmp.ne.s32.totalorder %s27, %s30
      %p36 = scmp.eq.s32.totalorder %s17, 0
      %p37 = por %p35, %p36
      %p38 = scmp.ne.s32.totalorder %s27, %s30
      %p39 = scmp.eq.s32.totalorder %s22, 1
      %p40 = por %p38, %p39
      %p41 = scmp.ne.s32.totalorder %s30, %s31
      %p42 = scmp.eq.s32.totalorder %s22, 0
      %p43 = por %p41, %p42
      %p44 = scmp.ne.s32.totalorder %s30, %s31
      %p45 = scmp.eq.s32.totalorder %s23, 1
      %p46 = por %p44, %p45
      %p48 = scmp.ne.s32.totalorder %s31, %s47
      %p49 = scmp.eq.s32.totalorder %s23, 0
      %p50 = por %p48, %p49
      %s52 = sadd.s32 %s51, 1
      %p55 = scmp.eq.s32.totalorder %s17, 1
      %p56 = scmp.ne.s32.totalorder %s51, %s53
      %p57 = scmp.eq.s32.totalorder %s17, 0
      %p58 = por %p56, %p57
      %p59 = scmp.ne.s32.totalorder %s51, %s53
      %p60 = scmp.eq.s32.totalorder %s22, 1
      %p61 = por %p59, %p60
      %p62 = scmp.ne.s32.totalorder %s53, %s54
      %p63 = scmp.eq.s32.totalorder %s22, 0
      %p64 = por %p62, %p63
      %p65 = scmp.ne.s32.totalorder %s53, %s54
      %p66 = scmp.eq.s32.totalorder %s23, 1
      %p67 = por %p65, %p66
      %p69 = scmp.ne.s32.totalorder %s54, %s68
      %p70 = scmp.eq.s32.totalorder %s23, 0
      %p71 = por %p69, %p70
      %s73 = sadd.s32 %s72, 1
      %p76 = scmp.eq.s32.totalorder %s17, 1
      %p77 = scmp.ne.s32.totalorder %s72, %s74
      %p78 = scmp.eq.s32.totalorder %s17, 0
      %p79 = por %p77, %p78
      %p80 = scmp.ne.s32.totalorder %s72, %s74
      %p81 = scmp.eq.s32.totalorder %s22, 1
      %p82 = por %p80, %p81
      %p83 = scmp.ne.s32.totalorder %s74, %s75
      %p84 = scmp.eq.s32.totalorder %s22, 0
      %p85 = por %p83, %p84
      %p86 = scmp.ne.s32.totalorder %s74, %s75
      %p87 = scmp.eq.s32.totalorder %s23, 1
      %p88 = por %p86, %p87
      %p90 = scmp.ne.s32.totalorder %s75, %s89
      %p91 = scmp.eq.s32.totalorder %s23, 0
      %p92 = por %p90, %p91
      %s94 = sadd.s32 %s93, 1
      %p97 = scmp.eq.s32.totalorder %s17, 1
      %p98 = scmp.ne.s32.totalorder %s93, %s95
      %p99 = scmp.eq.s32.totalorder %s17, 0
      %p100 = por %p98, %p99
      %p101 = scmp.ne.s32.totalorder %s93, %s95
      %p102 = scmp.eq.s32.totalorder %s22, 1
      %p103 = por %p101, %p102
      %p104 = scmp.ne.s32.totalorder %s95, %s96
      %p105 = scmp.eq.s32.totalorder %s22, 0
      %p106 = por %p104, %p105
      %p107 = scmp.ne.s32.totalorder %s95, %s96
      %p108 = scmp.eq.s32.totalorder %s23, 1
      %p109 = por %p107, %p108
      %p111 = scmp.ne.s32.totalorder %s96, %s110
      %p112 = scmp.eq.s32.totalorder %s23, 0
      %p113 = por %p111, %p112
      %s115 = sadd.s32 %s114, 1
      %p118 = scmp.eq.s32.totalorder %s17, 1
      %p119 = scmp.ne.s32.totalorder %s114, %s116
      %p120 = scmp.eq.s32.totalorder %s17, 0
      %p121 = por %p119, %p120
      %p122 = scmp.ne.s32.totalorder %s114, %s116
      %p123 = scmp.eq.s32.totalorder %s22, 1
      %p124 = por %p122, %p123
      %p125 = scmp.ne.s32.totalorder %s116, %s117
      %p126 = scmp.eq.s32.totalorder %s22, 0
      %p127 = por %p125, %p126
      %p128 = scmp.ne.s32.totalorder %s116, %s117
      %p129 = scmp.eq.s32.totalorder %s23, 1
      %p130 = por %p128, %p129
      %p132 = scmp.ne.s32.totalorder %s117, %s131
      %p133 = scmp.eq.s32.totalorder %s23, 0
      %p134 = por %p132, %p133
      %s135 = ssub.s32 %s17, %s24
      %p136 = scmp.eq.s32.totalorder %s135, 0
      %s138 = sadd.s32 %s137, 1
      %s139 = scalar_select %p136, %s137, %s138
      %p142 = pneg %p136
      %p143 = scmp.eq.s32.totalorder %s17, 1
      %p144 = por %p142, %p143
      %p145 = scmp.ne.s32.totalorder %s137, %s140
      %p146 = scmp.eq.s32.totalorder %s17, 0
      %p147 = por %p145, %p146
      %p148 = scmp.ne.s32.totalorder %s137, %s140
      %p149 = scmp.eq.s32.totalorder %s22, 1
      %p150 = por %p148, %p149
      %p151 = scmp.ne.s32.totalorder %s140, %s141
      %p152 = scmp.eq.s32.totalorder %s22, 0
      %p153 = por %p151, %p152
      %p154 = scmp.ne.s32.totalorder %s140, %s141
      %p155 = scmp.eq.s32.totalorder %s23, 1
      %p156 = por %p154, %p155
      %p158 = scmp.ne.s32.totalorder %s141, %s157
      %p159 = scmp.eq.s32.totalorder %s23, 0
      %p160 = por %p158, %p159
      %p161 = scmp.le.s32.totalorder 1, %s17
      %p162 = scmp.lt.s32.totalorder %s17, 3
      %p163 = pnand %p161, %p162
      %p164 = pneg %p163
      // Predicated region
      $region9: #{tpu_custom_call.1} parent=5 // pred_check
        _
      $region10: #{tpu_custom_call.1} parent=5 // pred_check_branch
        %166 = sbr.rel (%p163) target = $region12
      $region11: #{tpu_custom_call.1} parent=5 // pred_region
        %s167 = ssub.s32 %s17, 1
        // Predicated region
        $region13: #{tpu_custom_call.1} parent=11 // pred_check
          %p168 = pneg %p64
        $region14: #{tpu_custom_call.1} parent=11 // pred_check_branch
          %170 = sbr.rel (%p168) target = $region16
        $region15: #{tpu_custom_call.1} parent=11 // pred_region
          _
        $region16: #{tpu_custom_call.1} parent=11 // pred_fallthru
          _
        // Predicated region
        $region17: #{tpu_custom_call.1} parent=11 // pred_check
          %p171 = pneg %p85
        $region18: #{tpu_custom_call.1} parent=11 // pred_check_branch
          %173 = sbr.rel (%p171) target = $region20
        $region19: #{tpu_custom_call.1} parent=11 // pred_region
          _
        $region20: #{tpu_custom_call.1} parent=11 // pred_fallthru
          _
        // Predicated region
        $region21: #{tpu_custom_call.1} parent=11 // pred_check
          %p174 = pneg %p106
        $region22: #{tpu_custom_call.1} parent=11 // pred_check_branch
          %176 = sbr.rel (%p174) target = $region24
        $region23: #{tpu_custom_call.1} parent=11 // pred_region
          _
        $region24: #{tpu_custom_call.1} parent=11 // pred_fallthru
          _
        // Predicated region
        $region25: #{tpu_custom_call.1} parent=11 // pred_check
          %p177 = pneg %p127
        $region26: #{tpu_custom_call.1} parent=11 // pred_check_branch
          %179 = sbr.rel (%p177) target = $region28
        $region27: #{tpu_custom_call.1} parent=11 // pred_region
          _
        $region28: #{tpu_custom_call.1} parent=11 // pred_fallthru
          _
      $region12: #{tpu_custom_call.1} parent=5 // pred_fallthru
        _
      %p180 = scmp.lt.s32.totalorder %s17, 2
      // Predicated region
      $region29: #{tpu_custom_call.1} parent=5 // pred_check
        %p181 = pneg %p180
      $region30: #{tpu_custom_call.1} parent=5 // pred_check_branch
        %183 = sbr.rel (%p181) target = $region32
      $region31: #{tpu_custom_call.1} parent=5 // pred_region
        // Predicated region
        $region33: #{tpu_custom_call.1} parent=31 // pred_check
          %p184 = pneg %p37
        $region34: #{tpu_custom_call.1} parent=31 // pred_check_branch
          %186 = sbr.rel (%p184) target = $region36
        $region35: #{tpu_custom_call.1} parent=31 // pred_region
          %s187 = sand.u32 %s27, 1
          %s188 = scalar_lea.sflag [#allocation3], %s187
          %s189 = sand.u32 %s27, 1
          %s190 = smul.addr %s189, 128
          %s191 = scalar_lea.vmem [#allocation2], %s190
          %s193 = ssub.s32 2048, 2048
          %194 = vsyncadd %s188, %s193
          %s195 = smul.addr %s17, 16
          %s196 = smul.addr %s195, 128
          %s197 = scalar_lea.hbm %s0, %s196
          %s198 = sshll.u32 %s191, 4
          %s199 = int_to_ptr.vmem [resolvable:$true] %s198
          %204 = dma.hbm_to_vmem [thread:$0]  %s197, 2048, %s199, %s188, 256, 256, 16
        $region36: #{tpu_custom_call.1} parent=31 // pred_fallthru
          _
      $region32: #{tpu_custom_call.1} parent=5 // pred_fallthru
        _
      %p205 = scmp.le.s32.totalorder 1, %s17
      %p206 = scmp.lt.s32.totalorder %s17, 3
      %p207 = pnand %p205, %p206
      %p208 = pneg %p207
      // Predicated region
      $region37: #{tpu_custom_call.1} parent=5 // pred_check
        _
      $region38: #{tpu_custom_call.1} parent=5 // pred_check_branch
        %210 = sbr.rel (%p207) target = $region40
      $region39: #{tpu_custom_call.1} parent=5 // pred_region
        %s211 = ssub.s32 %s17, 1
        %s212 = sand.u32 %s30, 1
        %s213 = scalar_lea.sflag [#allocation3], %s212
        %s214 = sand.u32 %s30, 1
        %s215 = smul.addr %s214, 128
        %s216 = scalar_lea.vmem [#allocation2], %s215
        // Predicated region
        $region41: #{tpu_custom_call.1} parent=39 // pred_check
          %p217 = pneg %p43
        $region42: #{tpu_custom_call.1} parent=39 // pred_check_branch
          %219 = sbr.rel (%p217) target = $region44
        $region43: #{tpu_custom_call.1} parent=39 // pred_region
          %220 = dma.done %s213, 2048
        $region44: #{tpu_custom_call.1} parent=39 // pred_fallthru
          _
        %s221 = sand.u32 %s30, 1
        %s222 = scalar_lea.sflag [#allocation3], %s221
        %s223 = sand.u32 %s30, 1
        %s224 = smul.addr %s223, 128
        %s225 = scalar_lea.vmem [#allocation2], %s224
        %p226 = pneg %p43
        %p227 = pneg %p40
        %p228 = pneg %p64
        %p229 = pneg %p61
        %p230 = pneg %p85
        %p231 = pneg %p82
        %p232 = pneg %p106
        %p233 = pneg %p103
        %p234 = pneg %p127
        %p235 = pneg %p124
        %p236 = pneg %p153
        %p237 = pneg %p150
        %s238 = sand.u32 %s140, 1
        %s239 = scalar_lea.sflag [#allocation4], %s238
        %s240 = sand.u32 %s140, 1
        %s241 = smul.addr %s240, 128
        %s242 = scalar_lea.vmem [#allocation5], %s241
        %v243 = vlaneseq
        %v244 = vshrl.u32 %v243, 7
        %v245 = vadd.s32 %v244, 8
        %v246 = vadd.s32 %v244, 16
        %v247 = vadd.s32 %v244, 24
        %v248 = vadd.s32 %v244, 32
        %v249 = vadd.s32 %v244, 40
        %v250 = vadd.s32 %v244, 48
        %v251 = vadd.s32 %v244, 56
        %v252 = vadd.s32 %v244, 64
        %v253 = vadd.s32 %v244, 72
        %v254 = vadd.s32 %v244, 80
        %v255 = vadd.s32 %v244, 88
        %v256 = vadd.s32 %v244, 96
        %v257 = vadd.s32 %v244, 104
        %v258 = vadd.s32 %v244, 112
        %v259 = vadd.s32 %v244, 120
        %v260 = vadd.s32 %v244, 128
        %v261 = vadd.s32 %v244, 136
        %v262 = vadd.s32 %v244, 144
        %v263 = vadd.s32 %v244, 152
        %v264 = vadd.s32 %v244, 160
        %v265 = vadd.s32 %v244, 168
        %v266 = vadd.s32 %v244, 176
        %v267 = vadd.s32 %v244, 184
        %v268 = vadd.s32 %v244, 192
        %v269 = vadd.s32 %v244, 200
        %v270 = vadd.s32 %v244, 208
        %v271 = vadd.s32 %v244, 216
        %v272 = vadd.s32 %v244, 224
        %v273 = vadd.s32 %v244, 232
        %v274 = vadd.s32 %v244, 240
        %v275 = vadd.s32 %v244, 248
        %v276 = vlaneseq
        %v277 = vand.u32 %v276, 127
        %v278 = vshra.s32 %v244, 4
        %v279 = vshra.s32 %v245, 4
        %v280 = vshra.s32 %v246, 4
        %v281 = vshra.s32 %v247, 4
        %v282 = vshra.s32 %v248, 4
        %v283 = vshra.s32 %v249, 4
        %v284 = vshra.s32 %v250, 4
        %v285 = vshra.s32 %v251, 4
        %v286 = vshra.s32 %v252, 4
        %v287 = vshra.s32 %v253, 4
        %v288 = vshra.s32 %v254, 4
        %v289 = vshra.s32 %v255, 4
        %v290 = vshra.s32 %v256, 4
        %v291 = vshra.s32 %v257, 4
        %v292 = vshra.s32 %v258, 4
        %v293 = vshra.s32 %v259, 4
        %v294 = vshra.s32 %v260, 4
        %v295 = vshra.s32 %v261, 4
        %v296 = vshra.s32 %v262, 4
        %v297 = vshra.s32 %v263, 4
        %v298 = vshra.s32 %v264, 4
        %v299 = vshra.s32 %v265, 4
        %v300 = vshra.s32 %v266, 4
        %v301 = vshra.s32 %v267, 4
        %v302 = vshra.s32 %v268, 4
        %v303 = vshra.s32 %v269, 4
        %v304 = vshra.s32 %v270, 4
        %v305 = vshra.s32 %v271, 4
        %v306 = vshra.s32 %v272, 4
        %v307 = vshra.s32 %v273, 4
        %v308 = vshra.s32 %v274, 4
        %v309 = vshra.s32 %v275, 4
        %v310 = vand.u32 %v244, 15
        %v311 = vand.u32 %v245, 15
        %v312 = vand.u32 %v246, 15
        %v313 = vand.u32 %v247, 15
        %v314 = vand.u32 %v248, 15
        %v315 = vand.u32 %v249, 15
        %v316 = vand.u32 %v250, 15
        %v317 = vand.u32 %v251, 15
        %v318 = vand.u32 %v252, 15
        %v319 = vand.u32 %v253, 15
        %v320 = vand.u32 %v254, 15
        %v321 = vand.u32 %v255, 15
        %v322 = vand.u32 %v256, 15
        %v323 = vand.u32 %v257, 15
        %v324 = vand.u32 %v258, 15
        %v325 = vand.u32 %v259, 15
        %v326 = vand.u32 %v260, 15
        %v327 = vand.u32 %v261, 15
        %v328 = vand.u32 %v262, 15
        %v329 = vand.u32 %v263, 15
        %v330 = vand.u32 %v264, 15
        %v331 = vand.u32 %v265, 15
        %v332 = vand.u32 %v266, 15
        %v333 = vand.u32 %v267, 15
        %v334 = vand.u32 %v268, 15
        %v335 = vand.u32 %v269, 15
        %v336 = vand.u32 %v270, 15
        %v337 = vand.u32 %v271, 15
        %v338 = vand.u32 %v272, 15
        %v339 = vand.u32 %v273, 15
        %v340 = vand.u32 %v274, 15
        %v341 = vand.u32 %v275, 15
        %vm342 = vcmp.lt.s32.totalorder %v277, 16
        %vm343 = vcmp.eq.s32.totalorder %v277, %v278
        %vm344 = vcmp.eq.s32.totalorder %v277, %v279
        %vm345 = vcmp.eq.s32.totalorder %v277, %v280
        %vm346 = vcmp.eq.s32.totalorder %v277, %v281
        %vm347 = vcmp.eq.s32.totalorder %v277, %v282
        %vm348 = vcmp.eq.s32.totalorder %v277, %v283
        %vm349 = vcmp.eq.s32.totalorder %v277, %v284
        %vm350 = vcmp.eq.s32.totalorder %v277, %v285
        %vm351 = vcmp.eq.s32.totalorder %v277, %v286
        %vm352 = vcmp.eq.s32.totalorder %v277, %v287
        %vm353 = vcmp.eq.s32.totalorder %v277, %v288
        %vm354 = vcmp.eq.s32.totalorder %v277, %v289
        %vm355 = vcmp.eq.s32.totalorder %v277, %v290
        %vm356 = vcmp.eq.s32.totalorder %v277, %v291
        %vm357 = vcmp.eq.s32.totalorder %v277, %v292
        %vm358 = vcmp.eq.s32.totalorder %v277, %v293
        %vm359 = vcmp.eq.s32.totalorder %v277, %v294
        %vm360 = vcmp.eq.s32.totalorder %v277, %v295
        %vm361 = vcmp.eq.s32.totalorder %v277, %v296
        %vm362 = vcmp.eq.s32.totalorder %v277, %v297
        %vm363 = vcmp.eq.s32.totalorder %v277, %v298
        %vm364 = vcmp.eq.s32.totalorder %v277, %v299
        %vm365 = vcmp.eq.s32.totalorder %v277, %v300
        %vm366 = vcmp.eq.s32.totalorder %v277, %v301
        %vm367 = vcmp.eq.s32.totalorder %v277, %v302
        %vm368 = vcmp.eq.s32.totalorder %v277, %v303
        %vm369 = vcmp.eq.s32.totalorder %v277, %v304
        %vm370 = vcmp.eq.s32.totalorder %v277, %v305
        %vm371 = vcmp.eq.s32.totalorder %v277, %v306
        %vm372 = vcmp.eq.s32.totalorder %v277, %v307
        %vm373 = vcmp.eq.s32.totalorder %v277, %v308
        %vm374 = vcmp.eq.s32.totalorder %v277, %v309
        %v375 = vsel %vm343, 0.0625, 0.0
        %v376 = vsel %vm344, 0.0625, 0.0
        %v377 = vsel %vm345, 0.0625, 0.0
        %v378 = vsel %vm346, 0.0625, 0.0
        %v379 = vsel %vm347, 0.0625, 0.0
        %v380 = vsel %vm348, 0.0625, 0.0
        %v381 = vsel %vm349, 0.0625, 0.0
        %v382 = vsel %vm350, 0.0625, 0.0
        %v383 = vsel %vm351, 0.0625, 0.0
        %v384 = vsel %vm352, 0.0625, 0.0
        %v385 = vsel %vm353, 0.0625, 0.0
        %v386 = vsel %vm354, 0.0625, 0.0
        %v387 = vsel %vm355, 0.0625, 0.0
        %v388 = vsel %vm356, 0.0625, 0.0
        %v389 = vsel %vm357, 0.0625, 0.0
        %v390 = vsel %vm358, 0.0625, 0.0
        %v391 = vsel %vm359, 0.0625, 0.0
        %v392 = vsel %vm360, 0.0625, 0.0
        %v393 = vsel %vm361, 0.0625, 0.0
        %v394 = vsel %vm362, 0.0625, 0.0
        %v395 = vsel %vm363, 0.0625, 0.0
        %v396 = vsel %vm364, 0.0625, 0.0
        %v397 = vsel %vm365, 0.0625, 0.0
        %v398 = vsel %vm366, 0.0625, 0.0
        %v399 = vsel %vm367, 0.0625, 0.0
        %v400 = vsel %vm368, 0.0625, 0.0
        %v401 = vsel %vm369, 0.0625, 0.0
        %v402 = vsel %vm370, 0.0625, 0.0
        %v403 = vsel %vm371, 0.0625, 0.0
        %v404 = vsel %vm372, 0.0625, 0.0
        %v405 = vsel %vm373, 0.0625, 0.0
        %v406 = vsel %vm374, 0.0625, 0.0
        %v407 = vsub.s32 %v277, 16
        %vm408 = vcmp.eq.s32.totalorder %v407, %v310
        %vm409 = vcmp.eq.s32.totalorder %v407, %v311
        %vm410 = vcmp.eq.s32.totalorder %v407, %v312
        %vm411 = vcmp.eq.s32.totalorder %v407, %v313
        %vm412 = vcmp.eq.s32.totalorder %v407, %v314
        %vm413 = vcmp.eq.s32.totalorder %v407, %v315
        %vm414 = vcmp.eq.s32.totalorder %v407, %v316
        %vm415 = vcmp.eq.s32.totalorder %v407, %v317
        %vm416 = vcmp.eq.s32.totalorder %v407, %v318
        %vm417 = vcmp.eq.s32.totalorder %v407, %v319
        %vm418 = vcmp.eq.s32.totalorder %v407, %v320
        %vm419 = vcmp.eq.s32.totalorder %v407, %v321
        %vm420 = vcmp.eq.s32.totalorder %v407, %v322
        %vm421 = vcmp.eq.s32.totalorder %v407, %v323
        %vm422 = vcmp.eq.s32.totalorder %v407, %v324
        %vm423 = vcmp.eq.s32.totalorder %v407, %v325
        %vm424 = vcmp.eq.s32.totalorder %v407, %v326
        %vm425 = vcmp.eq.s32.totalorder %v407, %v327
        %vm426 = vcmp.eq.s32.totalorder %v407, %v328
        %vm427 = vcmp.eq.s32.totalorder %v407, %v329
        %vm428 = vcmp.eq.s32.totalorder %v407, %v330
        %vm429 = vcmp.eq.s32.totalorder %v407, %v331
        %vm430 = vcmp.eq.s32.totalorder %v407, %v332
        %vm431 = vcmp.eq.s32.totalorder %v407, %v333
        %vm432 = vcmp.eq.s32.totalorder %v407, %v334
        %vm433 = vcmp.eq.s32.totalorder %v407, %v335
        %vm434 = vcmp.eq.s32.totalorder %v407, %v336
        %vm435 = vcmp.eq.s32.totalorder %v407, %v337
        %vm436 = vcmp.eq.s32.totalorder %v407, %v338
        %vm437 = vcmp.eq.s32.totalorder %v407, %v339
        %vm438 = vcmp.eq.s32.totalorder %v407, %v340
        %vm439 = vcmp.eq.s32.totalorder %v407, %v341
        %v440 = vsel %vm408, 0.0625, 0.0
        %v441 = vsel %vm409, 0.0625, 0.0
        %v442 = vsel %vm410, 0.0625, 0.0
        %v443 = vsel %vm411, 0.0625, 0.0
        %v444 = vsel %vm412, 0.0625, 0.0
        %v445 = vsel %vm413, 0.0625, 0.0
        %v446 = vsel %vm414, 0.0625, 0.0
        %v447 = vsel %vm415, 0.0625, 0.0
        %v448 = vsel %vm416, 0.0625, 0.0
        %v449 = vsel %vm417, 0.0625, 0.0
        %v450 = vsel %vm418, 0.0625, 0.0
        %v451 = vsel %vm419, 0.0625, 0.0
        %v452 = vsel %vm420, 0.0625, 0.0
        %v453 = vsel %vm421, 0.0625, 0.0
        %v454 = vsel %vm422, 0.0625, 0.0
        %v455 = vsel %vm423, 0.0625, 0.0
        %v456 = vsel %vm424, 0.0625, 0.0
        %v457 = vsel %vm425, 0.0625, 0.0
        %v458 = vsel %vm426, 0.0625, 0.0
        %v459 = vsel %vm427, 0.0625, 0.0
        %v460 = vsel %vm428, 0.0625, 0.0
        %v461 = vsel %vm429, 0.0625, 0.0
        %v462 = vsel %vm430, 0.0625, 0.0
        %v463 = vsel %vm431, 0.0625, 0.0
        %v464 = vsel %vm432, 0.0625, 0.0
        %v465 = vsel %vm433, 0.0625, 0.0
        %v466 = vsel %vm434, 0.0625, 0.0
        %v467 = vsel %vm435, 0.0625, 0.0
        %v468 = vsel %vm436, 0.0625, 0.0
        %v469 = vsel %vm437, 0.0625, 0.0
        %v470 = vsel %vm438, 0.0625, 0.0
        %v471 = vsel %vm439, 0.0625, 0.0
        %v472 = vsel %vm342, %v375, %v440
        %v473 = vsel %vm342, %v376, %v441
        %v474 = vsel %vm342, %v377, %v442
        %v475 = vsel %vm342, %v378, %v443
        %v476 = vsel %vm342, %v379, %v444
        %v477 = vsel %vm342, %v380, %v445
        %v478 = vsel %vm342, %v381, %v446
        %v479 = vsel %vm342, %v382, %v447
        %v480 = vsel %vm342, %v383, %v448
        %v481 = vsel %vm342, %v384, %v449
        %v482 = vsel %vm342, %v385, %v450
        %v483 = vsel %vm342, %v386, %v451
        %v484 = vsel %vm342, %v387, %v452
        %v485 = vsel %vm342, %v388, %v453
        %v486 = vsel %vm342, %v389, %v454
        %v487 = vsel %vm342, %v390, %v455
        %v488 = vsel %vm342, %v391, %v456
        %v489 = vsel %vm342, %v392, %v457
        %v490 = vsel %vm342, %v393, %v458
        %v491 = vsel %vm342, %v394, %v459
        %v492 = vsel %vm342, %v395, %v460
        %v493 = vsel %vm342, %v396, %v461
        %v494 = vsel %vm342, %v397, %v462
        %v495 = vsel %vm342, %v398, %v463
        %v496 = vsel %vm342, %v399, %v464
        %v497 = vsel %vm342, %v400, %v465
        %v498 = vsel %vm342, %v401, %v466
        %v499 = vsel %vm342, %v402, %v467
        %v500 = vsel %vm342, %v403, %v468
        %v501 = vsel %vm342, %v404, %v469
        %v502 = vsel %vm342, %v405, %v470
        %v503 = vsel %vm342, %v406, %v471
        %v504 = vadd.s32 %v277, 128
        %v505 = vshra.s32 %v277, 4
        %v506 = vshra.s32 %v504, 4
        %vm507 = vcmp.eq.s32.totalorder %v244, %v505
        %vm508 = vcmp.eq.s32.totalorder %v244, %v506
        %vm509 = vcmp.eq.s32.totalorder %v245, %v505
        %vm510 = vcmp.eq.s32.totalorder %v245, %v506
        %v511 = vsel %vm507, 1, 0
        %v512 = vsel %vm508, 1, 0
        %v513 = vsel %vm509, 1, 0
        %v514 = vsel %vm510, 1, 0
        %v515 = vcvt.s32.f32 %v511
        %v516 = vcvt.s32.f32 %v512
        %v517 = vcvt.s32.f32 %v513
        %v518 = vcvt.s32.f32 %v514
        %v519 = vand.u32 %v277, 15
        %v520 = vand.u32 %v504, 15
        %vm521 = vcmp.eq.s32.totalorder %v244, %v519
        %vm522 = vcmp.eq.s32.totalorder %v244, %v520
        %vm523 = vcmp.eq.s32.totalorder %v245, %v519
        %vm524 = vcmp.eq.s32.totalorder %v245, %v520
        %v525 = vsel %vm521, 1, 0
        %v526 = vsel %vm522, 1, 0
        %v527 = vsel %vm523, 1, 0
        %v528 = vsel %vm524, 1, 0
        %v529 = vcvt.s32.f32 %v525
        %v530 = vcvt.s32.f32 %v526
        %v531 = vcvt.s32.f32 %v527
        %v532 = vcvt.s32.f32 %v528
        %v533 = vld [vmem:[%s216] sm:$0xff]
        %v534 = vld [vmem:[%s216 + $0x8] sm:$0xff]
        %v535 = vld [vmem:[%s216 + $0x10] sm:$0xff]
        %v536 = vld [vmem:[%s216 + $0x18] sm:$0xff]
        %v537 = vld [vmem:[%s216 + $0x20] sm:$0xff]
        %v538 = vld [vmem:[%s216 + $0x28] sm:$0xff]
        %v539 = vld [vmem:[%s216 + $0x30] sm:$0xff]
        %v540 = vld [vmem:[%s216 + $0x38] sm:$0xff]
        %v541 = vld [vmem:[%s216 + $0x40] sm:$0xff]
        %v542 = vld [vmem:[%s216 + $0x48] sm:$0xff]
        %v543 = vld [vmem:[%s216 + $0x50] sm:$0xff]
        %v544 = vld [vmem:[%s216 + $0x58] sm:$0xff]
        %v545 = vld [vmem:[%s216 + $0x60] sm:$0xff]
        %v546 = vld [vmem:[%s216 + $0x68] sm:$0xff]
        %v547 = vld [vmem:[%s216 + $0x70] sm:$0xff]
        %v548 = vld [vmem:[%s216 + $0x78] sm:$0xff]
        %549 = vmatprep.subr.mxu0 0.0
        %550 = vmatpush1.msra.mxu0 %v487
        %551 = vmatprep.subr.mxu0 0.0
        %552 = vmatpush1.msra.mxu0 %v486
        %553 = vmatprep.subr.mxu0 0.0
        %554 = vmatpush1.msra.mxu0 %v485
        %555 = vmatprep.subr.mxu0 0.0
        %556 = vmatpush1.msra.mxu0 %v484
        %557 = vmatprep.subr.mxu0 0.0
        %558 = vmatpush1.msra.mxu0 %v483
        %559 = vmatprep.subr.mxu0 0.0
        %560 = vmatpush1.msra.mxu0 %v482
        %561 = vmatprep.subr.mxu0 0.0
        %562 = vmatpush1.msra.mxu0 %v481
        %563 = vmatprep.subr.mxu0 0.0
        %564 = vmatpush1.msra.mxu0 %v480
        %565 = vmatprep.subr.mxu0 0.0
        %566 = vmatpush1.msra.mxu0 %v479
        %567 = vmatprep.subr.mxu0 0.0
        %568 = vmatpush1.msra.mxu0 %v478
        %569 = vmatprep.subr.mxu0 0.0
        %570 = vmatpush1.msra.mxu0 %v477
        %571 = vmatprep.subr.mxu0 0.0
        %572 = vmatpush1.msra.mxu0 %v476
        %573 = vmatprep.subr.mxu0 0.0
        %574 = vmatpush1.msra.mxu0 %v475
        %575 = vmatprep.subr.mxu0 0.0
        %576 = vmatpush1.msra.mxu0 %v474
        %577 = vmatprep.subr.mxu0 0.0
        %578 = vmatpush1.msra.mxu0 %v473
        %579 = vmatprep.subr.mxu0 0.0
        %580 = vmatpush1.msra.mxu0 %v472
        %581 = vmatprep.subr.mxu0 0.0
        %582 = vmatpush2.msra.mxu0 %v503
        %583 = vmatprep.subr.mxu0 0.0
        %584 = vmatpush2.msra.mxu0 %v502
        %585 = vmatprep.subr.mxu0 0.0
        %586 = vmatpush2.msra.mxu0 %v501
        %587 = vmatprep.subr.mxu0 0.0
        %588 = vmatpush2.msra.mxu0 %v500
        %589 = vmatprep.subr.mxu0 0.0
        %590 = vmatpush2.msra.mxu0 %v499
        %591 = vmatprep.subr.mxu0 0.0
        %592 = vmatpush2.msra.mxu0 %v498
        %593 = vmatprep.subr.mxu0 0.0
        %594 = vmatpush2.msra.mxu0 %v497
        %595 = vmatprep.subr.mxu0 0.0
        %596 = vmatpush2.msra.mxu0 %v496
        %597 = vmatprep.subr.mxu0 0.0
        %598 = vmatpush2.msra.mxu0 %v495
        %599 = vmatprep.subr.mxu0 0.0
        %600 = vmatpush2.msra.mxu0 %v494
        %601 = vmatprep.subr.mxu0 0.0
        %602 = vmatpush2.msra.mxu0 %v493
        %603 = vmatprep.subr.mxu0 0.0
        %604 = vmatpush2.msra.mxu0 %v492
        %605 = vmatprep.subr.mxu0 0.0
        %606 = vmatpush2.msra.mxu0 %v491
        %607 = vmatprep.subr.mxu0 0.0
        %608 = vmatpush2.msra.mxu0 %v490
        %609 = vmatprep.subr.mxu0 0.0
        %610 = vmatpush2.msra.mxu0 %v489
        %611 = vmatprep.subr.mxu0 0.0
        %612 = vmatpush2.msra.mxu0 %v488
        %613 = vmatprep.mubr.f32.mxu0 %v534
        %614 = vmatmul.mubr.f32.gmra.mxu0 %v533
        %v615 = vpop.f32.mrf.mxu0
        %v616 = vadd.f32 0.0, %v615
        %v617 = vpop.f32.mrf.mxu0
        %618 = vmatprep.mubr.f32.mxu0 %v536
        %619 = vmatmul.mubr.f32.gmra.mxu0 %v535
        %v620 = vpop.f32.mrf.mxu0
        %v621 = vadd.f32 0.0, %v620
        %v622 = vpop.f32.mrf.mxu0
        %623 = vmatprep.mubr.f32.mxu0 %v538
        %624 = vmatmul.mubr.f32.gmra.mxu0 %v537
        %v625 = vpop.f32.mrf.mxu0
        %v626 = vadd.f32 0.0, %v625
        %v627 = vpop.f32.mrf.mxu0
        %628 = vmatprep.mubr.f32.mxu0 %v540
        %629 = vmatmul.mubr.f32.gmra.mxu0 %v539
        %v630 = vpop.f32.mrf.mxu0
        %v631 = vadd.f32 0.0, %v630
        %v632 = vpop.f32.mrf.mxu0
        %633 = vmatprep.mubr.f32.mxu0 %v542
        %634 = vmatmul.mubr.f32.gmra.mxu0 %v541
        %v635 = vpop.f32.mrf.mxu0
        %v636 = vadd.f32 0.0, %v635
        %v637 = vpop.f32.mrf.mxu0
        %638 = vmatprep.mubr.f32.mxu0 %v544
        %639 = vmatmul.mubr.f32.gmra.mxu0 %v543
        %v640 = vpop.f32.mrf.mxu0
        %v641 = vadd.f32 0.0, %v640
        %v642 = vpop.f32.mrf.mxu0
        %643 = vmatprep.mubr.f32.mxu0 %v546
        %644 = vmatmul.mubr.f32.gmra.mxu0 %v545
        %v645 = vpop.f32.mrf.mxu0
        %v646 = vadd.f32 0.0, %v645
        %v647 = vpop.f32.mrf.mxu0
        %648 = vmatprep.mubr.f32.mxu0 %v548
        %649 = vmatmul.mubr.f32.gmra.mxu0 %v547
        %v650 = vpop.f32.mrf.mxu0
        %v651 = vadd.f32 0.0, %v650
        %v652 = vpop.f32.mrf.mxu0
        %653 = vdwg.mxu0
        %v654 = vld [vmem:[%s1] sm:$0xf]
        %v655 = vld [vmem:[%s2] sm:$0xf]
        %v656 = vld [vmem:[%s3] sm:$0xff]
        %v657 = vld [vmem:[%s3 + $0x8] sm:$0xff]
        %v658 = vld [vmem:[%s3 + $0x10] sm:$0xff]
        %v659 = vld [vmem:[%s3 + $0x18] sm:$0xff]
        %v660 = vld [vmem:[%s3 + $0x20] sm:$0xff]
        %v661 = vld [vmem:[%s3 + $0x28] sm:$0xff]
        %v662 = vld [vmem:[%s3 + $0x30] sm:$0xff]
        %v663 = vld [vmem:[%s3 + $0x38] sm:$0xff]
        %v664 = vld [vmem:[%s4] sm:$0xff]
        %v665 = vld [vmem:[%s4 + $0x8] sm:$0xff]
        %v666 = vld [vmem:[%s4 + $0x10] sm:$0xff]
        %v667 = vld [vmem:[%s4 + $0x18] sm:$0xff]
        %v668 = vld [vmem:[%s4 + $0x20] sm:$0xff]
        %v669 = vld [vmem:[%s4 + $0x28] sm:$0xff]
        %v670 = vld [vmem:[%s4 + $0x30] sm:$0xff]
        %v671 = vld [vmem:[%s4 + $0x38] sm:$0xff]
        %673 = vset.pattern.permute.xlu0 0
        %674 = vperm.xlu0 %673, %v655
        %v675 = vpop.permute.xlu0 %674
        %vm677 = vcmask 523264
        %v679 = vsel %vm677, %v654, 0
        %681 = vmatprep.subr.mxu0 0.0
        %682 = vmatpush1.msra.mxu0 0.0
        %683 = vmatprep.subr.mxu0 0.0
        %684 = vmatpush1.msra.mxu0 0.0
        %685 = vmatprep.subr.mxu0 0.0
        %686 = vmatpush1.msra.mxu0 0.0
        %687 = vmatprep.subr.mxu0 0.0
        %688 = vmatpush1.msra.mxu0 0.0
        %689 = vmatprep.subr.mxu0 0.0
        %690 = vmatpush1.msra.mxu0 0.0
        %691 = vmatprep.subr.mxu0 0.0
        %692 = vmatpush1.msra.mxu0 0.0
        %693 = vmatprep.subr.mxu0 0.0
        %694 = vmatpush1.msra.mxu0 0.0
        %695 = vmatprep.subr.mxu0 0.0
        %696 = vmatpush1.msra.mxu0 0.0
        %697 = vmatprep.subr.mxu0 0.0
        %698 = vmatpush1.msra.mxu0 %v651
        %699 = vmatprep.subr.mxu0 0.0
        %700 = vmatpush1.msra.mxu0 %v646
        %701 = vmatprep.subr.mxu0 0.0
        %702 = vmatpush1.msra.mxu0 %v641
        %703 = vmatprep.subr.mxu0 0.0
        %704 = vmatpush1.msra.mxu0 %v636
        %705 = vmatprep.subr.mxu0 0.0
        %706 = vmatpush1.msra.mxu0 %v631
        %707 = vmatprep.subr.mxu0 0.0
        %708 = vmatpush1.msra.mxu0 %v626
        %709 = vmatprep.subr.mxu0 0.0
        %710 = vmatpush1.msra.mxu0 %v621
        %711 = vmatprep.subr.mxu0 0.0
        %712 = vmatpush1.msra.mxu0 %v616
        %713 = vmatprep.subr.mxu0 0.0
        %714 = vmatpush2.msra.mxu0 0.0
        %715 = vmatprep.subr.mxu0 0.0
        %716 = vmatpush2.msra.mxu0 0.0
        %717 = vmatprep.subr.mxu0 0.0
        %718 = vmatpush2.msra.mxu0 0.0
        %719 = vmatprep.subr.mxu0 0.0
        %720 = vmatpush2.msra.mxu0 0.0
        %721 = vmatprep.subr.mxu0 0.0
        %722 = vmatpush2.msra.mxu0 0.0
        %723 = vmatprep.subr.mxu0 0.0
        %724 = vmatpush2.msra.mxu0 0.0
        %725 = vmatprep.subr.mxu0 0.0
        %726 = vmatpush2.msra.mxu0 0.0
        %727 = vmatprep.subr.mxu0 0.0
        %728 = vmatpush2.msra.mxu0 0.0
        %729 = vmatprep.subr.mxu0 0.0
        %730 = vmatpush2.msra.mxu0 0.0
        %731 = vmatprep.subr.mxu0 0.0
        %732 = vmatpush2.msra.mxu0 0.0
        %733 = vmatprep.subr.mxu0 0.0
        %734 = vmatpush2.msra.mxu0 0.0
        %735 = vmatprep.subr.mxu0 0.0
        %736 = vmatpush2.msra.mxu0 0.0
        %737 = vmatprep.subr.mxu0 0.0
        %738 = vmatpush2.msra.mxu0 0.0
        %739 = vmatprep.subr.mxu0 0.0
        %740 = vmatpush2.msra.mxu0 0.0
        %741 = vmatprep.subr.mxu0 0.0
        %742 = vmatpush2.msra.mxu0 0.0
        %743 = vmatprep.subr.mxu0 0.0
        %744 = vmatpush2.msra.mxu0 0.0
        %745 = vmatprep.mubr.f32.mxu0 0.0
        %746 = vmatmul.mubr.f32.gmra.mxu0 %v679
        %v747 = vpop.f32.mrf.mxu0
        %v748 = vadd.f32 %v675, %v747
        %v749 = vpop.f32.mrf.mxu0
        %750 = vdwg.mxu0
        %v751 = vmax.f32 %v748, 0.0
        %vm752 = vcmask 31744
        %v754 = vsel %vm752, %v656, 0
        %v757 = vsel %vm752, %v657, 0
        %v760 = vsel %vm752, %v658, 0
        %v763 = vsel %vm752, %v659, 0
        %v766 = vsel %vm752, %v660, 0
        %v769 = vsel %vm752, %v661, 0
        %v772 = vsel %vm752, %v662, 0
        %v775 = vsel %vm752, %v663, 0
        %vm777 = vcmask 1043456
        %v779 = vsel %vm777, %v751, 0
        %781 = vmatprep.subr.mxu0 0.0
        %782 = vmatpush1.msra.mxu0 0.0
        %783 = vmatprep.subr.mxu0 0.0
        %784 = vmatpush1.msra.mxu0 0.0
        %785 = vmatprep.subr.mxu0 0.0
        %786 = vmatpush1.msra.mxu0 0.0
        %787 = vmatprep.subr.mxu0 0.0
        %788 = vmatpush1.msra.mxu0 0.0
        %789 = vmatprep.subr.mxu0 0.0
        %790 = vmatpush1.msra.mxu0 0.0
        %791 = vmatprep.subr.mxu0 0.0
        %792 = vmatpush1.msra.mxu0 0.0
        %793 = vmatprep.subr.mxu0 0.0
        %794 = vmatpush1.msra.mxu0 0.0
        %795 = vmatprep.subr.mxu0 0.0
        %796 = vmatpush1.msra.mxu0 0.0
        %797 = vmatprep.subr.mxu0 0.0
        %798 = vmatpush1.msra.mxu0 0.0
        %799 = vmatprep.subr.mxu0 0.0
        %800 = vmatpush1.msra.mxu0 0.0
        %801 = vmatprep.subr.mxu0 0.0
        %802 = vmatpush1.msra.mxu0 0.0
        %803 = vmatprep.subr.mxu0 0.0
        %804 = vmatpush1.msra.mxu0 0.0
        %805 = vmatprep.subr.mxu0 0.0
        %806 = vmatpush1.msra.mxu0 0.0
        %807 = vmatprep.subr.mxu0 0.0
        %808 = vmatpush1.msra.mxu0 0.0
        %809 = vmatprep.subr.mxu0 0.0
        %810 = vmatpush1.msra.mxu0 0.0
        %811 = vmatprep.subr.mxu0 0.0
        %812 = vmatpush1.msra.mxu0 %v779
        %813 = vmatprep.subr.mxu0 0.0
        %814 = vmatpush2.msra.mxu0 0.0
        %815 = vmatprep.subr.mxu0 0.0
        %816 = vmatpush2.msra.mxu0 0.0
        %817 = vmatprep.subr.mxu0 0.0
        %818 = vmatpush2.msra.mxu0 0.0
        %819 = vmatprep.subr.mxu0 0.0
        %820 = vmatpush2.msra.mxu0 0.0
        %821 = vmatprep.subr.mxu0 0.0
        %822 = vmatpush2.msra.mxu0 0.0
        %823 = vmatprep.subr.mxu0 0.0
        %824 = vmatpush2.msra.mxu0 0.0
        %825 = vmatprep.subr.mxu0 0.0
        %826 = vmatpush2.msra.mxu0 0.0
        %827 = vmatprep.subr.mxu0 0.0
        %828 = vmatpush2.msra.mxu0 0.0
        %829 = vmatprep.subr.mxu0 0.0
        %830 = vmatpush2.msra.mxu0 0.0
        %831 = vmatprep.subr.mxu0 0.0
        %832 = vmatpush2.msra.mxu0 0.0
        %833 = vmatprep.subr.mxu0 0.0
        %834 = vmatpush2.msra.mxu0 0.0
        %835 = vmatprep.subr.mxu0 0.0
        %836 = vmatpush2.msra.mxu0 0.0
        %837 = vmatprep.subr.mxu0 0.0
        %838 = vmatpush2.msra.mxu0 0.0
        %839 = vmatprep.subr.mxu0 0.0
        %840 = vmatpush2.msra.mxu0 0.0
        %841 = vmatprep.subr.mxu0 0.0
        %842 = vmatpush2.msra.mxu0 0.0
        %843 = vmatprep.subr.mxu0 0.0
        %844 = vmatpush2.msra.mxu0 0.0
        %845 = vmatprep.mubr.f32.mxu0 0.0
        %846 = vmatmul.mubr.f32.gmra.mxu0 %v754
        %v847 = vpop.f32.mrf.mxu0
        %v848 = vadd.f32 0.0, %v847
        %v849 = vpop.f32.mrf.mxu0
        %850 = vmatprep.mubr.f32.mxu0 0.0
        %851 = vmatmul.mubr.f32.gmra.mxu0 %v757
        %v852 = vpop.f32.mrf.mxu0
        %v853 = vadd.f32 0.0, %v852
        %v854 = vpop.f32.mrf.mxu0
        %855 = vmatprep.mubr.f32.mxu0 0.0
        %856 = vmatmul.mubr.f32.gmra.mxu0 %v760
        %v857 = vpop.f32.mrf.mxu0
        %v858 = vadd.f32 0.0, %v857
        %v859 = vpop.f32.mrf.mxu0
        %860 = vmatprep.mubr.f32.mxu0 0.0
        %861 = vmatmul.mubr.f32.gmra.mxu0 %v763
        %v862 = vpop.f32.mrf.mxu0
        %v863 = vadd.f32 0.0, %v862
        %v864 = vpop.f32.mrf.mxu0
        %865 = vmatprep.mubr.f32.mxu0 0.0
        %866 = vmatmul.mubr.f32.gmra.mxu0 %v766
        %v867 = vpop.f32.mrf.mxu0
        %v868 = vadd.f32 0.0, %v867
        %v869 = vpop.f32.mrf.mxu0
        %870 = vmatprep.mubr.f32.mxu0 0.0
        %871 = vmatmul.mubr.f32.gmra.mxu0 %v769
        %v872 = vpop.f32.mrf.mxu0
        %v873 = vadd.f32 0.0, %v872
        %v874 = vpop.f32.mrf.mxu0
        %875 = vmatprep.mubr.f32.mxu0 0.0
        %876 = vmatmul.mubr.f32.gmra.mxu0 %v772
        %v877 = vpop.f32.mrf.mxu0
        %v878 = vadd.f32 0.0, %v877
        %v879 = vpop.f32.mrf.mxu0
        %880 = vmatprep.mubr.f32.mxu0 0.0
        %881 = vmatmul.mubr.f32.gmra.mxu0 %v775
        %v882 = vpop.f32.mrf.mxu0
        %v883 = vadd.f32 0.0, %v882
        %v884 = vpop.f32.mrf.mxu0
        %885 = vdwg.mxu0
        %v886 = vxor.u32 %v848, 2147483648
        %v887 = vxor.u32 %v853, 2147483648
        %v888 = vxor.u32 %v858, 2147483648
        %v889 = vxor.u32 %v863, 2147483648
        %v890 = vxor.u32 %v868, 2147483648
        %v891 = vxor.u32 %v873, 2147483648
        %v892 = vxor.u32 %v878, 2147483648
        %v893 = vxor.u32 %v883, 2147483648
        %v894 = vmul.f32 %v886, 1.442695
        %v895 = vpow.pop %v894
        %v896 = vmul.f32 %v887, 1.442695
        %v897 = vpow.pop %v896
        %v898 = vmul.f32 %v888, 1.442695
        %v899 = vpow.pop %v898
        %v900 = vmul.f32 %v889, 1.442695
        %v901 = vpow.pop %v900
        %v902 = vmul.f32 %v890, 1.442695
        %v903 = vpow.pop %v902
        %v904 = vmul.f32 %v891, 1.442695
        %v905 = vpow.pop %v904
        %v906 = vmul.f32 %v892, 1.442695
        %v907 = vpow.pop %v906
        %v908 = vmul.f32 %v893, 1.442695
        %v909 = vpow.pop %v908
        %v910 = vadd.f32 %v895, 1.0
        %v911 = vadd.f32 %v897, 1.0
        %v912 = vadd.f32 %v899, 1.0
        %v913 = vadd.f32 %v901, 1.0
        %v914 = vadd.f32 %v903, 1.0
        %v915 = vadd.f32 %v905, 1.0
        %v916 = vadd.f32 %v907, 1.0
        %v917 = vadd.f32 %v909, 1.0
        %v918 = vrcp.pop %v910
        %v919 = vmul.f32 1.0, %v918
        %v920 = vrcp.pop %v911
        %v921 = vmul.f32 1.0, %v920
        %v922 = vrcp.pop %v912
        %v923 = vmul.f32 1.0, %v922
        %v924 = vrcp.pop %v913
        %v925 = vmul.f32 1.0, %v924
        %v926 = vrcp.pop %v914
        %v927 = vmul.f32 1.0, %v926
        %v928 = vrcp.pop %v915
        %v929 = vmul.f32 1.0, %v928
        %v930 = vrcp.pop %v916
        %v931 = vmul.f32 1.0, %v930
        %v932 = vrcp.pop %v917
        %v933 = vmul.f32 1.0, %v932
        %934 = vrot.lane.b32.xlu0 %v751, 112
        %v935 = vpop.permute.xlu0 %934
        %v937 = vsel %vm752, %v664, 0
        %v940 = vsel %vm752, %v665, 0
        %v943 = vsel %vm752, %v666, 0
        %v946 = vsel %vm752, %v667, 0
        %v949 = vsel %vm752, %v668, 0
        %v952 = vsel %vm752, %v669, 0
        %v955 = vsel %vm752, %v670, 0
        %v958 = vsel %vm752, %v671, 0
        %v960 = vsel %vm777, %v935, 0
        %962 = vmatprep.subr.mxu0 0.0
        %963 = vmatpush1.msra.mxu0 0.0
        %964 = vmatprep.subr.mxu0 0.0
        %965 = vmatpush1.msra.mxu0 0.0
        %966 = vmatprep.subr.mxu0 0.0
        %967 = vmatpush1.msra.mxu0 0.0
        %968 = vmatprep.subr.mxu0 0.0
        %969 = vmatpush1.msra.mxu0 0.0
        %970 = vmatprep.subr.mxu0 0.0
        %971 = vmatpush1.msra.mxu0 0.0
        %972 = vmatprep.subr.mxu0 0.0
        %973 = vmatpush1.msra.mxu0 0.0
        %974 = vmatprep.subr.mxu0 0.0
        %975 = vmatpush1.msra.mxu0 0.0
        %976 = vmatprep.subr.mxu0 0.0
        %977 = vmatpush1.msra.mxu0 0.0
        %978 = vmatprep.subr.mxu0 0.0
        %979 = vmatpush1.msra.mxu0 0.0
        %980 = vmatprep.subr.mxu0 0.0
        %981 = vmatpush1.msra.mxu0 0.0
        %982 = vmatprep.subr.mxu0 0.0
        %983 = vmatpush1.msra.mxu0 0.0
        %984 = vmatprep.subr.mxu0 0.0
        %985 = vmatpush1.msra.mxu0 0.0
        %986 = vmatprep.subr.mxu0 0.0
        %987 = vmatpush1.msra.mxu0 0.0
        %988 = vmatprep.subr.mxu0 0.0
        %989 = vmatpush1.msra.mxu0 0.0
        %990 = vmatprep.subr.mxu0 0.0
        %991 = vmatpush1.msra.mxu0 0.0
        %992 = vmatprep.subr.mxu0 0.0
        %993 = vmatpush1.msra.mxu0 %v960
        %994 = vmatprep.subr.mxu0 0.0
        %995 = vmatpush2.msra.mxu0 0.0
        %996 = vmatprep.subr.mxu0 0.0
        %997 = vmatpush2.msra.mxu0 0.0
        %998 = vmatprep.subr.mxu0 0.0
        %999 = vmatpush2.msra.mxu0 0.0
        %1000 = vmatprep.subr.mxu0 0.0
        %1001 = vmatpush2.msra.mxu0 0.0
        %1002 = vmatprep.subr.mxu0 0.0
        %1003 = vmatpush2.msra.mxu0 0.0
        %1004 = vmatprep.subr.mxu0 0.0
        %1005 = vmatpush2.msra.mxu0 0.0
        %1006 = vmatprep.subr.mxu0 0.0
        %1007 = vmatpush2.msra.mxu0 0.0
        %1008 = vmatprep.subr.mxu0 0.0
        %1009 = vmatpush2.msra.mxu0 0.0
        %1010 = vmatprep.subr.mxu0 0.0
        %1011 = vmatpush2.msra.mxu0 0.0
        %1012 = vmatprep.subr.mxu0 0.0
        %1013 = vmatpush2.msra.mxu0 0.0
        %1014 = vmatprep.subr.mxu0 0.0
        %1015 = vmatpush2.msra.mxu0 0.0
        %1016 = vmatprep.subr.mxu0 0.0
        %1017 = vmatpush2.msra.mxu0 0.0
        %1018 = vmatprep.subr.mxu0 0.0
        %1019 = vmatpush2.msra.mxu0 0.0
        %1020 = vmatprep.subr.mxu0 0.0
        %1021 = vmatpush2.msra.mxu0 0.0
        %1022 = vmatprep.subr.mxu0 0.0
        %1023 = vmatpush2.msra.mxu0 0.0
        %1024 = vmatprep.subr.mxu0 0.0
        %1025 = vmatpush2.msra.mxu0 0.0
        %1026 = vmatprep.mubr.f32.mxu0 0.0
        %1027 = vmatmul.mubr.f32.gmra.mxu0 %v937
        %v1028 = vpop.f32.mrf.mxu0
        %v1029 = vadd.f32 0.0, %v1028
        %v1030 = vpop.f32.mrf.mxu0
        %1031 = vmatprep.mubr.f32.mxu0 0.0
        %1032 = vmatmul.mubr.f32.gmra.mxu0 %v940
        %v1033 = vpop.f32.mrf.mxu0
        %v1034 = vadd.f32 0.0, %v1033
        %v1035 = vpop.f32.mrf.mxu0
        %1036 = vmatprep.mubr.f32.mxu0 0.0
        %1037 = vmatmul.mubr.f32.gmra.mxu0 %v943
        %v1038 = vpop.f32.mrf.mxu0
        %v1039 = vadd.f32 0.0, %v1038
        %v1040 = vpop.f32.mrf.mxu0
        %1041 = vmatprep.mubr.f32.mxu0 0.0
        %1042 = vmatmul.mubr.f32.gmra.mxu0 %v946
        %v1043 = vpop.f32.mrf.mxu0
        %v1044 = vadd.f32 0.0, %v1043
        %v1045 = vpop.f32.mrf.mxu0
        %1046 = vmatprep.mubr.f32.mxu0 0.0
        %1047 = vmatmul.mubr.f32.gmra.mxu0 %v949
        %v1048 = vpop.f32.mrf.mxu0
        %v1049 = vadd.f32 0.0, %v1048
        %v1050 = vpop.f32.mrf.mxu0
        %1051 = vmatprep.mubr.f32.mxu0 0.0
        %1052 = vmatmul.mubr.f32.gmra.mxu0 %v952
        %v1053 = vpop.f32.mrf.mxu0
        %v1054 = vadd.f32 0.0, %v1053
        %v1055 = vpop.f32.mrf.mxu0
        %1056 = vmatprep.mubr.f32.mxu0 0.0
        %1057 = vmatmul.mubr.f32.gmra.mxu0 %v955
        %v1058 = vpop.f32.mrf.mxu0
        %v1059 = vadd.f32 0.0, %v1058
        %v1060 = vpop.f32.mrf.mxu0
        %1061 = vmatprep.mubr.f32.mxu0 0.0
        %1062 = vmatmul.mubr.f32.gmra.mxu0 %v958
        %v1063 = vpop.f32.mrf.mxu0
        %v1064 = vadd.f32 0.0, %v1063
        %v1065 = vpop.f32.mrf.mxu0
        %1066 = vdwg.mxu0
        %v1067 = vxor.u32 %v1029, 2147483648
        %v1068 = vxor.u32 %v1034, 2147483648
        %v1069 = vxor.u32 %v1039, 2147483648
        %v1070 = vxor.u32 %v1044, 2147483648
        %v1071 = vxor.u32 %v1049, 2147483648
        %v1072 = vxor.u32 %v1054, 2147483648
        %v1073 = vxor.u32 %v1059, 2147483648
        %v1074 = vxor.u32 %v1064, 2147483648
        %v1075 = vmul.f32 %v1067, 1.442695
        %v1076 = vpow.pop %v1075
        %v1077 = vmul.f32 %v1068, 1.442695
        %v1078 = vpow.pop %v1077
        %v1079 = vmul.f32 %v1069, 1.442695
        %v1080 = vpow.pop %v1079
        %v1081 = vmul.f32 %v1070, 1.442695
        %v1082 = vpow.pop %v1081
        %v1083 = vmul.f32 %v1071, 1.442695
        %v1084 = vpow.pop %v1083
        %v1085 = vmul.f32 %v1072, 1.442695
        %v1086 = vpow.pop %v1085
        %v1087 = vmul.f32 %v1073, 1.442695
        %v1088 = vpow.pop %v1087
        %v1089 = vmul.f32 %v1074, 1.442695
        %v1090 = vpow.pop %v1089
        %v1091 = vadd.f32 %v1076, 1.0
        %v1092 = vadd.f32 %v1078, 1.0
        %v1093 = vadd.f32 %v1080, 1.0
        %v1094 = vadd.f32 %v1082, 1.0
        %v1095 = vadd.f32 %v1084, 1.0
        %v1096 = vadd.f32 %v1086, 1.0
        %v1097 = vadd.f32 %v1088, 1.0
        %v1098 = vadd.f32 %v1090, 1.0
        %v1099 = vrcp.pop %v1091
        %v1100 = vmul.f32 1.0, %v1099
        %v1101 = vrcp.pop %v1092
        %v1102 = vmul.f32 1.0, %v1101
        %v1103 = vrcp.pop %v1093
        %v1104 = vmul.f32 1.0, %v1103
        %v1105 = vrcp.pop %v1094
        %v1106 = vmul.f32 1.0, %v1105
        %v1107 = vrcp.pop %v1095
        %v1108 = vmul.f32 1.0, %v1107
        %v1109 = vrcp.pop %v1096
        %v1110 = vmul.f32 1.0, %v1109
        %v1111 = vrcp.pop %v1097
        %v1112 = vmul.f32 1.0, %v1111
        %v1113 = vrcp.pop %v1098
        %v1114 = vmul.f32 1.0, %v1113
        %vm1115 = vcmask 130048
        %v1117 = vsel %vm1115, %v919, 0
        %v1120 = vsel %vm1115, %v921, 0
        %v1123 = vsel %vm1115, %v923, 0
        %v1126 = vsel %vm1115, %v925, 0
        %v1129 = vsel %vm1115, %v927, 0
        %v1132 = vsel %vm1115, %v929, 0
        %v1135 = vsel %vm1115, %v931, 0
        %v1138 = vsel %vm1115, %v933, 0
        %1140 = vmatprep.subr.mxu0 0.0
        %1141 = vmatpush1.msra.mxu0 0.0
        %1142 = vmatprep.subr.mxu0 0.0
        %1143 = vmatpush1.msra.mxu0 0.0
        %1144 = vmatprep.subr.mxu0 0.0
        %1145 = vmatpush1.msra.mxu0 0.0
        %1146 = vmatprep.subr.mxu0 0.0
        %1147 = vmatpush1.msra.mxu0 0.0
        %1148 = vmatprep.subr.mxu0 0.0
        %1149 = vmatpush1.msra.mxu0 0.0
        %1150 = vmatprep.subr.mxu0 0.0
        %1151 = vmatpush1.msra.mxu0 0.0
        %1152 = vmatprep.subr.mxu0 0.0
        %1153 = vmatpush1.msra.mxu0 0.0
        %1154 = vmatprep.subr.mxu0 0.0
        %1155 = vmatpush1.msra.mxu0 0.0
        %1156 = vmatprep.subr.mxu0 0.0
        %1157 = vmatpush1.msra.mxu0 0.0
        %1158 = vmatprep.subr.mxu0 0.0
        %1159 = vmatpush1.msra.mxu0 0.0
        %1160 = vmatprep.subr.mxu0 0.0
        %1161 = vmatpush1.msra.mxu0 0.0
        %1162 = vmatprep.subr.mxu0 0.0
        %1163 = vmatpush1.msra.mxu0 0.0
        %1164 = vmatprep.subr.mxu0 0.0
        %1165 = vmatpush1.msra.mxu0 0.0
        %1166 = vmatprep.subr.mxu0 0.0
        %1167 = vmatpush1.msra.mxu0 0.0
        %1168 = vmatprep.subr.mxu0 0.0
        %1169 = vmatpush1.msra.mxu0 %v517
        %1170 = vmatprep.subr.mxu0 0.0
        %1171 = vmatpush1.msra.mxu0 %v515
        %1172 = vmatprep.subr.mxu0 0.0
        %1173 = vmatpush2.msra.mxu0 0.0
        %1174 = vmatprep.subr.mxu0 0.0
        %1175 = vmatpush2.msra.mxu0 0.0
        %1176 = vmatprep.subr.mxu0 0.0
        %1177 = vmatpush2.msra.mxu0 0.0
        %1178 = vmatprep.subr.mxu0 0.0
        %1179 = vmatpush2.msra.mxu0 0.0
        %1180 = vmatprep.subr.mxu0 0.0
        %1181 = vmatpush2.msra.mxu0 0.0
        %1182 = vmatprep.subr.mxu0 0.0
        %1183 = vmatpush2.msra.mxu0 0.0
        %1184 = vmatprep.subr.mxu0 0.0
        %1185 = vmatpush2.msra.mxu0 0.0
        %1186 = vmatprep.subr.mxu0 0.0
        %1187 = vmatpush2.msra.mxu0 0.0
        %1188 = vmatprep.subr.mxu0 0.0
        %1189 = vmatpush2.msra.mxu0 0.0
        %1190 = vmatprep.subr.mxu0 0.0
        %1191 = vmatpush2.msra.mxu0 0.0
        %1192 = vmatprep.subr.mxu0 0.0
        %1193 = vmatpush2.msra.mxu0 0.0
        %1194 = vmatprep.subr.mxu0 0.0
        %1195 = vmatpush2.msra.mxu0 0.0
        %1196 = vmatprep.subr.mxu0 0.0
        %1197 = vmatpush2.msra.mxu0 0.0
        %1198 = vmatprep.subr.mxu0 0.0
        %1199 = vmatpush2.msra.mxu0 0.0
        %1200 = vmatprep.subr.mxu0 0.0
        %1201 = vmatpush2.msra.mxu0 0.0
        %1202 = vmatprep.subr.mxu0 0.0
        %1203 = vmatpush2.msra.mxu0 0.0
        %1204 = vmatprep.mubr.f32.mxu0 0.0
        %1205 = vmatmul.mubr.f32.gmra.mxu0 %v1117
        %v1206 = vpop.f32.mrf.mxu0
        %v1207 = vadd.f32 0.0, %v1206
        %v1208 = vpop.f32.mrf.mxu0
        %1209 = vmatprep.mubr.f32.mxu0 0.0
        %1210 = vmatmul.mubr.f32.gmra.mxu0 %v1120
        %v1211 = vpop.f32.mrf.mxu0
        %v1212 = vadd.f32 0.0, %v1211
        %v1213 = vpop.f32.mrf.mxu0
        %1214 = vmatprep.mubr.f32.mxu0 0.0
        %1215 = vmatmul.mubr.f32.gmra.mxu0 %v1123
        %v1216 = vpop.f32.mrf.mxu0
        %v1217 = vadd.f32 0.0, %v1216
        %v1218 = vpop.f32.mrf.mxu0
        %1219 = vmatprep.mubr.f32.mxu0 0.0
        %1220 = vmatmul.mubr.f32.gmra.mxu0 %v1126
        %v1221 = vpop.f32.mrf.mxu0
        %v1222 = vadd.f32 0.0, %v1221
        %v1223 = vpop.f32.mrf.mxu0
        %1224 = vmatprep.mubr.f32.mxu0 0.0
        %1225 = vmatmul.mubr.f32.gmra.mxu0 %v1129
        %v1226 = vpop.f32.mrf.mxu0
        %v1227 = vadd.f32 0.0, %v1226
        %v1228 = vpop.f32.mrf.mxu0
        %1229 = vmatprep.mubr.f32.mxu0 0.0
        %1230 = vmatmul.mubr.f32.gmra.mxu0 %v1132
        %v1231 = vpop.f32.mrf.mxu0
        %v1232 = vadd.f32 0.0, %v1231
        %v1233 = vpop.f32.mrf.mxu0
        %1234 = vmatprep.mubr.f32.mxu0 0.0
        %1235 = vmatmul.mubr.f32.gmra.mxu0 %v1135
        %v1236 = vpop.f32.mrf.mxu0
        %v1237 = vadd.f32 0.0, %v1236
        %v1238 = vpop.f32.mrf.mxu0
        %1239 = vmatprep.mubr.f32.mxu0 0.0
        %1240 = vmatmul.mubr.f32.gmra.mxu0 %v1138
        %v1241 = vpop.f32.mrf.mxu0
        %v1242 = vadd.f32 0.0, %v1241
        %v1243 = vpop.f32.mrf.mxu0
        %1244 = vdwg.mxu0
        %v1246 = vsel %vm1115, %v1100, 0
        %v1249 = vsel %vm1115, %v1102, 0
        %v1252 = vsel %vm1115, %v1104, 0
        %v1255 = vsel %vm1115, %v1106, 0
        %v1258 = vsel %vm1115, %v1108, 0
        %v1261 = vsel %vm1115, %v1110, 0
        %v1264 = vsel %vm1115, %v1112, 0
        %v1267 = vsel %vm1115, %v1114, 0
        %1269 = vmatprep.subr.mxu0 0.0
        %1270 = vmatpush1.msra.mxu0 0.0
        %1271 = vmatprep.subr.mxu0 0.0
        %1272 = vmatpush1.msra.mxu0 0.0
        %1273 = vmatprep.subr.mxu0 0.0
        %1274 = vmatpush1.msra.mxu0 0.0
        %1275 = vmatprep.subr.mxu0 0.0
        %1276 = vmatpush1.msra.mxu0 0.0
        %1277 = vmatprep.subr.mxu0 0.0
        %1278 = vmatpush1.msra.mxu0 0.0
        %1279 = vmatprep.subr.mxu0 0.0
        %1280 = vmatpush1.msra.mxu0 0.0
        %1281 = vmatprep.subr.mxu0 0.0
        %1282 = vmatpush1.msra.mxu0 0.0
        %1283 = vmatprep.subr.mxu0 0.0
        %1284 = vmatpush1.msra.mxu0 0.0
        %1285 = vmatprep.subr.mxu0 0.0
        %1286 = vmatpush1.msra.mxu0 0.0
        %1287 = vmatprep.subr.mxu0 0.0
        %1288 = vmatpush1.msra.mxu0 0.0
        %1289 = vmatprep.subr.mxu0 0.0
        %1290 = vmatpush1.msra.mxu0 0.0
        %1291 = vmatprep.subr.mxu0 0.0
        %1292 = vmatpush1.msra.mxu0 0.0
        %1293 = vmatprep.subr.mxu0 0.0
        %1294 = vmatpush1.msra.mxu0 0.0
        %1295 = vmatprep.subr.mxu0 0.0
        %1296 = vmatpush1.msra.mxu0 0.0
        %1297 = vmatprep.subr.mxu0 0.0
        %1298 = vmatpush1.msra.mxu0 %v531
        %1299 = vmatprep.subr.mxu0 0.0
        %1300 = vmatpush1.msra.mxu0 %v529
        %1301 = vmatprep.subr.mxu0 0.0
        %1302 = vmatpush2.msra.mxu0 0.0
        %1303 = vmatprep.subr.mxu0 0.0
        %1304 = vmatpush2.msra.mxu0 0.0
        %1305 = vmatprep.subr.mxu0 0.0
        %1306 = vmatpush2.msra.mxu0 0.0
        %1307 = vmatprep.subr.mxu0 0.0
        %1308 = vmatpush2.msra.mxu0 0.0
        %1309 = vmatprep.subr.mxu0 0.0
        %1310 = vmatpush2.msra.mxu0 0.0
        %1311 = vmatprep.subr.mxu0 0.0
        %1312 = vmatpush2.msra.mxu0 0.0
        %1313 = vmatprep.subr.mxu0 0.0
        %1314 = vmatpush2.msra.mxu0 0.0
        %1315 = vmatprep.subr.mxu0 0.0
        %1316 = vmatpush2.msra.mxu0 0.0
        %1317 = vmatprep.subr.mxu0 0.0
        %1318 = vmatpush2.msra.mxu0 0.0
        %1319 = vmatprep.subr.mxu0 0.0
        %1320 = vmatpush2.msra.mxu0 0.0
        %1321 = vmatprep.subr.mxu0 0.0
        %1322 = vmatpush2.msra.mxu0 0.0
        %1323 = vmatprep.subr.mxu0 0.0
        %1324 = vmatpush2.msra.mxu0 0.0
        %1325 = vmatprep.subr.mxu0 0.0
        %1326 = vmatpush2.msra.mxu0 0.0
        %1327 = vmatprep.subr.mxu0 0.0
        %1328 = vmatpush2.msra.mxu0 0.0
        %1329 = vmatprep.subr.mxu0 0.0
        %1330 = vmatpush2.msra.mxu0 0.0
        %1331 = vmatprep.subr.mxu0 0.0
        %1332 = vmatpush2.msra.mxu0 0.0
        %1333 = vmatprep.mubr.f32.mxu0 0.0
        %1334 = vmatmul.mubr.f32.gmra.mxu0 %v1246
        %v1335 = vpop.f32.mrf.mxu0
        %v1336 = vadd.f32 0.0, %v1335
        %v1337 = vpop.f32.mrf.mxu0
        %1338 = vmatprep.mubr.f32.mxu0 0.0
        %1339 = vmatmul.mubr.f32.gmra.mxu0 %v1249
        %v1340 = vpop.f32.mrf.mxu0
        %v1341 = vadd.f32 0.0, %v1340
        %v1342 = vpop.f32.mrf.mxu0
        %1343 = vmatprep.mubr.f32.mxu0 0.0
        %1344 = vmatmul.mubr.f32.gmra.mxu0 %v1252
        %v1345 = vpop.f32.mrf.mxu0
        %v1346 = vadd.f32 0.0, %v1345
        %v1347 = vpop.f32.mrf.mxu0
        %1348 = vmatprep.mubr.f32.mxu0 0.0
        %1349 = vmatmul.mubr.f32.gmra.mxu0 %v1255
        %v1350 = vpop.f32.mrf.mxu0
        %v1351 = vadd.f32 0.0, %v1350
        %v1352 = vpop.f32.mrf.mxu0
        %1353 = vmatprep.mubr.f32.mxu0 0.0
        %1354 = vmatmul.mubr.f32.gmra.mxu0 %v1258
        %v1355 = vpop.f32.mrf.mxu0
        %v1356 = vadd.f32 0.0, %v1355
        %v1357 = vpop.f32.mrf.mxu0
        %1358 = vmatprep.mubr.f32.mxu0 0.0
        %1359 = vmatmul.mubr.f32.gmra.mxu0 %v1261
        %v1360 = vpop.f32.mrf.mxu0
        %v1361 = vadd.f32 0.0, %v1360
        %v1362 = vpop.f32.mrf.mxu0
        %1363 = vmatprep.mubr.f32.mxu0 0.0
        %1364 = vmatmul.mubr.f32.gmra.mxu0 %v1264
        %v1365 = vpop.f32.mrf.mxu0
        %v1366 = vadd.f32 0.0, %v1365
        %v1367 = vpop.f32.mrf.mxu0
        %1368 = vmatprep.mubr.f32.mxu0 0.0
        %1369 = vmatmul.mubr.f32.gmra.mxu0 %v1267
        %v1370 = vpop.f32.mrf.mxu0
        %v1371 = vadd.f32 0.0, %v1370
        %v1372 = vpop.f32.mrf.mxu0
        %1373 = vdwg.mxu0
        %v1374 = vmul.f32 %v1207, %v1336
        %v1375 = vmul.f32 %v1212, %v1341
        %v1376 = vmul.f32 %v1217, %v1346
        %v1377 = vmul.f32 %v1222, %v1351
        %v1378 = vmul.f32 %v1227, %v1356
        %v1379 = vmul.f32 %v1232, %v1361
        %v1380 = vmul.f32 %v1237, %v1366
        %v1381 = vmul.f32 %v1242, %v1371
        %v1382 = vld [vmem:[%s216] sm:$0xff]
        %v1383 = vld [vmem:[%s216 + $0x10] sm:$0xff]
        %v1384 = vld [vmem:[%s216 + $0x20] sm:$0xff]
        %v1385 = vld [vmem:[%s216 + $0x30] sm:$0xff]
        %v1386 = vld [vmem:[%s216 + $0x40] sm:$0xff]
        %v1387 = vld [vmem:[%s216 + $0x50] sm:$0xff]
        %v1388 = vld [vmem:[%s216 + $0x60] sm:$0xff]
        %v1389 = vld [vmem:[%s216 + $0x70] sm:$0xff]
        %v1390 = vmul.f32 %v1382, %v1374
        %v1391 = vmul.f32 %v1383, %v1375
        %v1392 = vmul.f32 %v1384, %v1376
        %v1393 = vmul.f32 %v1385, %v1377
        %v1394 = vmul.f32 %v1386, %v1378
        %v1395 = vmul.f32 %v1387, %v1379
        %v1396 = vmul.f32 %v1388, %v1380
        %v1397 = vmul.f32 %v1389, %v1381
        %1398 = vst [vmem:[%s242] sm:$0xff] %v1390
        %1399 = vst [vmem:[%s242 + $0x10] sm:$0xff] %v1391
        %1400 = vst [vmem:[%s242 + $0x20] sm:$0xff] %v1392
        %1401 = vst [vmem:[%s242 + $0x30] sm:$0xff] %v1393
        %1402 = vst [vmem:[%s242 + $0x40] sm:$0xff] %v1394
        %1403 = vst [vmem:[%s242 + $0x50] sm:$0xff] %v1395
        %1404 = vst [vmem:[%s242 + $0x60] sm:$0xff] %v1396
        %1405 = vst [vmem:[%s242 + $0x70] sm:$0xff] %v1397
        %1406 = vmatprep.subr.mxu0 0.0
        %1407 = vmatpush1.msra.mxu0 0.0
        %1408 = vmatprep.subr.mxu0 0.0
        %1409 = vmatpush1.msra.mxu0 0.0
        %1410 = vmatprep.subr.mxu0 0.0
        %1411 = vmatpush1.msra.mxu0 0.0
        %1412 = vmatprep.subr.mxu0 0.0
        %1413 = vmatpush1.msra.mxu0 0.0
        %1414 = vmatprep.subr.mxu0 0.0
        %1415 = vmatpush1.msra.mxu0 0.0
        %1416 = vmatprep.subr.mxu0 0.0
        %1417 = vmatpush1.msra.mxu0 0.0
        %1418 = vmatprep.subr.mxu0 0.0
        %1419 = vmatpush1.msra.mxu0 0.0
        %1420 = vmatprep.subr.mxu0 0.0
        %1421 = vmatpush1.msra.mxu0 0.0
        %1422 = vmatprep.subr.mxu0 0.0
        %1423 = vmatpush1.msra.mxu0 0.0
        %1424 = vmatprep.subr.mxu0 0.0
        %1425 = vmatpush1.msra.mxu0 0.0
        %1426 = vmatprep.subr.mxu0 0.0
        %1427 = vmatpush1.msra.mxu0 0.0
        %1428 = vmatprep.subr.mxu0 0.0
        %1429 = vmatpush1.msra.mxu0 0.0
        %1430 = vmatprep.subr.mxu0 0.0
        %1431 = vmatpush1.msra.mxu0 0.0
        %1432 = vmatprep.subr.mxu0 0.0
        %1433 = vmatpush1.msra.mxu0 0.0
        %1434 = vmatprep.subr.mxu0 0.0
        %1435 = vmatpush1.msra.mxu0 %v518
        %1436 = vmatprep.subr.mxu0 0.0
        %1437 = vmatpush1.msra.mxu0 %v516
        %1438 = vmatprep.subr.mxu0 0.0
        %1439 = vmatpush2.msra.mxu0 0.0
        %1440 = vmatprep.subr.mxu0 0.0
        %1441 = vmatpush2.msra.mxu0 0.0
        %1442 = vmatprep.subr.mxu0 0.0
        %1443 = vmatpush2.msra.mxu0 0.0
        %1444 = vmatprep.subr.mxu0 0.0
        %1445 = vmatpush2.msra.mxu0 0.0
        %1446 = vmatprep.subr.mxu0 0.0
        %1447 = vmatpush2.msra.mxu0 0.0
        %1448 = vmatprep.subr.mxu0 0.0
        %1449 = vmatpush2.msra.mxu0 0.0
        %1450 = vmatprep.subr.mxu0 0.0
        %1451 = vmatpush2.msra.mxu0 0.0
        %1452 = vmatprep.subr.mxu0 0.0
        %1453 = vmatpush2.msra.mxu0 0.0
        %1454 = vmatprep.subr.mxu0 0.0
        %1455 = vmatpush2.msra.mxu0 0.0
        %1456 = vmatprep.subr.mxu0 0.0
        %1457 = vmatpush2.msra.mxu0 0.0
        %1458 = vmatprep.subr.mxu0 0.0
        %1459 = vmatpush2.msra.mxu0 0.0
        %1460 = vmatprep.subr.mxu0 0.0
        %1461 = vmatpush2.msra.mxu0 0.0
        %1462 = vmatprep.subr.mxu0 0.0
        %1463 = vmatpush2.msra.mxu0 0.0
        %1464 = vmatprep.subr.mxu0 0.0
        %1465 = vmatpush2.msra.mxu0 0.0
        %1466 = vmatprep.subr.mxu0 0.0
        %1467 = vmatpush2.msra.mxu0 0.0
        %1468 = vmatprep.subr.mxu0 0.0
        %1469 = vmatpush2.msra.mxu0 0.0
        %1470 = vmatprep.mubr.f32.mxu0 0.0
        %1471 = vmatmul.mubr.f32.gmra.mxu0 %v1117
        %v1472 = vpop.f32.mrf.mxu0
        %v1473 = vadd.f32 0.0, %v1472
        %v1474 = vpop.f32.mrf.mxu0
        %1475 = vmatprep.mubr.f32.mxu0 0.0
        %1476 = vmatmul.mubr.f32.gmra.mxu0 %v1120
        %v1477 = vpop.f32.mrf.mxu0
        %v1478 = vadd.f32 0.0, %v1477
        %v1479 = vpop.f32.mrf.mxu0
        %1480 = vmatprep.mubr.f32.mxu0 0.0
        %1481 = vmatmul.mubr.f32.gmra.mxu0 %v1123
        %v1482 = vpop.f32.mrf.mxu0
        %v1483 = vadd.f32 0.0, %v1482
        %v1484 = vpop.f32.mrf.mxu0
        %1485 = vmatprep.mubr.f32.mxu0 0.0
        %1486 = vmatmul.mubr.f32.gmra.mxu0 %v1126
        %v1487 = vpop.f32.mrf.mxu0
        %v1488 = vadd.f32 0.0, %v1487
        %v1489 = vpop.f32.mrf.mxu0
        %1490 = vmatprep.mubr.f32.mxu0 0.0
        %1491 = vmatmul.mubr.f32.gmra.mxu0 %v1129
        %v1492 = vpop.f32.mrf.mxu0
        %v1493 = vadd.f32 0.0, %v1492
        %v1494 = vpop.f32.mrf.mxu0
        %1495 = vmatprep.mubr.f32.mxu0 0.0
        %1496 = vmatmul.mubr.f32.gmra.mxu0 %v1132
        %v1497 = vpop.f32.mrf.mxu0
        %v1498 = vadd.f32 0.0, %v1497
        %v1499 = vpop.f32.mrf.mxu0
        %1500 = vmatprep.mubr.f32.mxu0 0.0
        %1501 = vmatmul.mubr.f32.gmra.mxu0 %v1135
        %v1502 = vpop.f32.mrf.mxu0
        %v1503 = vadd.f32 0.0, %v1502
        %v1504 = vpop.f32.mrf.mxu0
        %1505 = vmatprep.mubr.f32.mxu0 0.0
        %1506 = vmatmul.mubr.f32.gmra.mxu0 %v1138
        %v1507 = vpop.f32.mrf.mxu0
        %v1508 = vadd.f32 0.0, %v1507
        %v1509 = vpop.f32.mrf.mxu0
        %1510 = vdwg.mxu0
        %1511 = vmatprep.subr.mxu0 0.0
        %1512 = vmatpush1.msra.mxu0 0.0
        %1513 = vmatprep.subr.mxu0 0.0
        %1514 = vmatpush1.msra.mxu0 0.0
        %1515 = vmatprep.subr.mxu0 0.0
        %1516 = vmatpush1.msra.mxu0 0.0
        %1517 = vmatprep.subr.mxu0 0.0
        %1518 = vmatpush1.msra.mxu0 0.0
        %1519 = vmatprep.subr.mxu0 0.0
        %1520 = vmatpush1.msra.mxu0 0.0
        %1521 = vmatprep.subr.mxu0 0.0
        %1522 = vmatpush1.msra.mxu0 0.0
        %1523 = vmatprep.subr.mxu0 0.0
        %1524 = vmatpush1.msra.mxu0 0.0
        %1525 = vmatprep.subr.mxu0 0.0
        %1526 = vmatpush1.msra.mxu0 0.0
        %1527 = vmatprep.subr.mxu0 0.0
        %1528 = vmatpush1.msra.mxu0 0.0
        %1529 = vmatprep.subr.mxu0 0.0
        %1530 = vmatpush1.msra.mxu0 0.0
        %1531 = vmatprep.subr.mxu0 0.0
        %1532 = vmatpush1.msra.mxu0 0.0
        %1533 = vmatprep.subr.mxu0 0.0
        %1534 = vmatpush1.msra.mxu0 0.0
        %1535 = vmatprep.subr.mxu0 0.0
        %1536 = vmatpush1.msra.mxu0 0.0
        %1537 = vmatprep.subr.mxu0 0.0
        %1538 = vmatpush1.msra.mxu0 0.0
        %1539 = vmatprep.subr.mxu0 0.0
        %1540 = vmatpush1.msra.mxu0 %v532
        %1541 = vmatprep.subr.mxu0 0.0
        %1542 = vmatpush1.msra.mxu0 %v530
        %1543 = vmatprep.subr.mxu0 0.0
        %1544 = vmatpush2.msra.mxu0 0.0
        %1545 = vmatprep.subr.mxu0 0.0
        %1546 = vmatpush2.msra.mxu0 0.0
        %1547 = vmatprep.subr.mxu0 0.0
        %1548 = vmatpush2.msra.mxu0 0.0
        %1549 = vmatprep.subr.mxu0 0.0
        %1550 = vmatpush2.msra.mxu0 0.0
        %1551 = vmatprep.subr.mxu0 0.0
        %1552 = vmatpush2.msra.mxu0 0.0
        %1553 = vmatprep.subr.mxu0 0.0
        %1554 = vmatpush2.msra.mxu0 0.0
        %1555 = vmatprep.subr.mxu0 0.0
        %1556 = vmatpush2.msra.mxu0 0.0
        %1557 = vmatprep.subr.mxu0 0.0
        %1558 = vmatpush2.msra.mxu0 0.0
        %1559 = vmatprep.subr.mxu0 0.0
        %1560 = vmatpush2.msra.mxu0 0.0
        %1561 = vmatprep.subr.mxu0 0.0
        %1562 = vmatpush2.msra.mxu0 0.0
        %1563 = vmatprep.subr.mxu0 0.0
        %1564 = vmatpush2.msra.mxu0 0.0
        %1565 = vmatprep.subr.mxu0 0.0
        %1566 = vmatpush2.msra.mxu0 0.0
        %1567 = vmatprep.subr.mxu0 0.0
        %1568 = vmatpush2.msra.mxu0 0.0
        %1569 = vmatprep.subr.mxu0 0.0
        %1570 = vmatpush2.msra.mxu0 0.0
        %1571 = vmatprep.subr.mxu0 0.0
        %1572 = vmatpush2.msra.mxu0 0.0
        %1573 = vmatprep.subr.mxu0 0.0
        %1574 = vmatpush2.msra.mxu0 0.0
        %1575 = vmatprep.mubr.f32.mxu0 0.0
        %1576 = vmatmul.mubr.f32.gmra.mxu0 %v1246
        %v1577 = vpop.f32.mrf.mxu0
        %v1578 = vadd.f32 0.0, %v1577
        %v1579 = vpop.f32.mrf.mxu0
        %1580 = vmatprep.mubr.f32.mxu0 0.0
        %1581 = vmatmul.mubr.f32.gmra.mxu0 %v1249
        %v1582 = vpop.f32.mrf.mxu0
        %v1583 = vadd.f32 0.0, %v1582
        %v1584 = vpop.f32.mrf.mxu0
        %1585 = vmatprep.mubr.f32.mxu0 0.0
        %1586 = vmatmul.mubr.f32.gmra.mxu0 %v1252
        %v1587 = vpop.f32.mrf.mxu0
        %v1588 = vadd.f32 0.0, %v1587
        %v1589 = vpop.f32.mrf.mxu0
        %1590 = vmatprep.mubr.f32.mxu0 0.0
        %1591 = vmatmul.mubr.f32.gmra.mxu0 %v1255
        %v1592 = vpop.f32.mrf.mxu0
        %v1593 = vadd.f32 0.0, %v1592
        %v1594 = vpop.f32.mrf.mxu0
        %1595 = vmatprep.mubr.f32.mxu0 0.0
        %1596 = vmatmul.mubr.f32.gmra.mxu0 %v1258
        %v1597 = vpop.f32.mrf.mxu0
        %v1598 = vadd.f32 0.0, %v1597
        %v1599 = vpop.f32.mrf.mxu0
        %1600 = vmatprep.mubr.f32.mxu0 0.0
        %1601 = vmatmul.mubr.f32.gmra.mxu0 %v1261
        %v1602 = vpop.f32.mrf.mxu0
        %v1603 = vadd.f32 0.0, %v1602
        %v1604 = vpop.f32.mrf.mxu0
        %1605 = vmatprep.mubr.f32.mxu0 0.0
        %1606 = vmatmul.mubr.f32.gmra.mxu0 %v1264
        %v1607 = vpop.f32.mrf.mxu0
        %v1608 = vadd.f32 0.0, %v1607
        %v1609 = vpop.f32.mrf.mxu0
        %1610 = vmatprep.mubr.f32.mxu0 0.0
        %1611 = vmatmul.mubr.f32.gmra.mxu0 %v1267
        %v1612 = vpop.f32.mrf.mxu0
        %v1613 = vadd.f32 0.0, %v1612
        %v1614 = vpop.f32.mrf.mxu0
        %1615 = vdwg.mxu0
        %v1616 = vmul.f32 %v1473, %v1578
        %v1617 = vmul.f32 %v1478, %v1583
        %v1618 = vmul.f32 %v1483, %v1588
        %v1619 = vmul.f32 %v1488, %v1593
        %v1620 = vmul.f32 %v1493, %v1598
        %v1621 = vmul.f32 %v1498, %v1603
        %v1622 = vmul.f32 %v1503, %v1608
        %v1623 = vmul.f32 %v1508, %v1613
        %v1624 = vld [vmem:[%s216 + $0x8] sm:$0xff]
        %v1625 = vld [vmem:[%s216 + $0x18] sm:$0xff]
        %v1626 = vld [vmem:[%s216 + $0x28] sm:$0xff]
        %v1627 = vld [vmem:[%s216 + $0x38] sm:$0xff]
        %v1628 = vld [vmem:[%s216 + $0x48] sm:$0xff]
        %v1629 = vld [vmem:[%s216 + $0x58] sm:$0xff]
        %v1630 = vld [vmem:[%s216 + $0x68] sm:$0xff]
        %v1631 = vld [vmem:[%s216 + $0x78] sm:$0xff]
        %v1632 = vmul.f32 %v1624, %v1616
        %v1633 = vmul.f32 %v1625, %v1617
        %v1634 = vmul.f32 %v1626, %v1618
        %v1635 = vmul.f32 %v1627, %v1619
        %v1636 = vmul.f32 %v1628, %v1620
        %v1637 = vmul.f32 %v1629, %v1621
        %v1638 = vmul.f32 %v1630, %v1622
        %v1639 = vmul.f32 %v1631, %v1623
        %1640 = vst [vmem:[%s242 + $0x8] sm:$0xff] %v1632
        %1641 = vst [vmem:[%s242 + $0x18] sm:$0xff] %v1633
        %1642 = vst [vmem:[%s242 + $0x28] sm:$0xff] %v1634
        %1643 = vst [vmem:[%s242 + $0x38] sm:$0xff] %v1635
        %1644 = vst [vmem:[%s242 + $0x48] sm:$0xff] %v1636
        %1645 = vst [vmem:[%s242 + $0x58] sm:$0xff] %v1637
        %1646 = vst [vmem:[%s242 + $0x68] sm:$0xff] %v1638
        %1647 = vst [vmem:[%s242 + $0x78] sm:$0xff] %v1639
        %s1648 = sand.u32 %s140, 1
        %s1649 = scalar_lea.sflag [#allocation4], %s1648
        %s1650 = sand.u32 %s140, 1
        %s1651 = smul.addr %s1650, 128
        %s1652 = scalar_lea.vmem [#allocation5], %s1651
        // Predicated region
        $region45: #{tpu_custom_call.1} parent=39 // pred_check
          %p1653 = pneg %p150
        $region46: #{tpu_custom_call.1} parent=39 // pred_check_branch
          %1655 = sbr.rel (%p1653) target = $region48
        $region47: #{tpu_custom_call.1} parent=39 // pred_region
          %s1657 = ssub.s32 2048, 2048
          %1658 = vsyncadd %s1649, %s1657
          %s1659 = smul.addr %s22, 16
          %s1660 = smul.addr %s1659, 128
          %s1661 = scalar_lea.hbm %s5, %s1660
          %s1662 = sshll.u32 %s1652, 4
          %s1663 = int_to_ptr.vmem [resolvable:$true] %s1662
          %1668 = dma.vmem_to_hbm [thread:$0]  %s1663, 2048, %s1661, %s1649, 256, 256, 16
        $region48: #{tpu_custom_call.1} parent=39 // pred_fallthru
          _
      $region40: #{tpu_custom_call.1} parent=5 // pred_fallthru
        _
      %p1669 = scmp.le.s32.totalorder 2, %s17
      // Predicated region
      $region49: #{tpu_custom_call.1} parent=5 // pred_check
        %p1670 = pneg %p1669
      $region50: #{tpu_custom_call.1} parent=5 // pred_check_branch
        %1672 = sbr.rel (%p1670) target = $region52
      $region51: #{tpu_custom_call.1} parent=5 // pred_region
        %s1673 = ssub.s32 %s17, 2
        // Predicated region
        $region53: #{tpu_custom_call.1} parent=51 // pred_check
          %p1674 = pneg %p156
        $region54: #{tpu_custom_call.1} parent=51 // pred_check_branch
          %1676 = sbr.rel (%p1674) target = $region56
        $region55: #{tpu_custom_call.1} parent=51 // pred_region
          %s1677 = sand.u32 %s141, 1
          %s1678 = scalar_lea.sflag [#allocation4], %s1677
          %s1679 = sand.u32 %s141, 1
          %s1680 = smul.addr %s1679, 128
          %s1681 = scalar_lea.vmem [#allocation5], %s1680
          %1682 = dma.done %s1678, 2048
        $region56: #{tpu_custom_call.1} parent=51 // pred_fallthru
          _
      $region52: #{tpu_custom_call.1} parent=5 // pred_fallthru
        _
    $region6: #{tpu_custom_call.1} parent=1 // loop_footer
      %s21 = sadd.s32 1, %s17
    $region7: #{tpu_custom_call.1} parent=1 // loop_footer_branch
      %16 = sbr.rel target = $region3
    $region8: #{tpu_custom_call.1} parent=1 // loop_exit
      _
    %1683 = vsyncpa [#allocation3], 1
    %s1684 = scalar_lea.sflag [#allocation3], 1
    %1685 = vsyncpa %s1684, 1
    %1686 = vsyncpa [#allocation4], 1
    %s1687 = scalar_lea.sflag [#allocation4], 1
    %1688 = vsyncpa %s1687, 1

</llo_original>
